<compile_context>
chip_gen: v7x
topology: tpu7x:2x2x1
jax: 0.10.0
libtpu: 0.0.40
codegen_flags: <defaults>
</compile_context>

<pallas_src>
import math

import jax
import jax.numpy as jnp
from jax import lax
from jax.experimental import pallas as pl
from jax.experimental.pallas import tpu as pltpu


# ----------------------------------- Pallas kernel ------------------------------------

def _make_downsample_kernel(Ho, Wo, Cout):
    """Fused (window-extract + contract + bias) kernel; one image per grid step."""

    def kernel(xs_ref, w_ref, b_ref, o_ref):
        # xs_ref: (1, Hs, Ws, 4*Cin)  space-to-depth cell grid of the zero-padded input
        # w_ref : (4, 4*Cin, Cout)    per-cell packed conv weights (grid-invariant, VMEM resident)
        # b_ref : (1, 1, Cout)        bias
        # o_ref : (1, Ho, Wo, Cout)   conv output (NHWC)
        xs = xs_ref[0]                                            # (Hs, Ws, 4*Cin)
        kdim = xs.shape[-1]                                       # 4*Cin

        acc = jnp.zeros((Ho, Wo, Cout), jnp.float32)
        # 3x3 / stride-2 conv == sum of 4 dense contractions over the space-to-depth cells.
        for a in range(2):
            for b in range(2):
                slab = xs[a:a + Ho, b:b + Wo, :]                  # (Ho, Wo, 4*Cin) static window
                w_cell = jnp.broadcast_to(w_ref[2 * a + b], (Ho, kdim, Cout))
                acc = acc + jnp.einsum("hwk,hkc->hwc", slab, w_cell,
                                       preferred_element_type=jnp.float32)

        o_ref[0] = (acc + b_ref[...]).astype(o_ref.dtype)

    return kernel


# ---------------------------------- host-side glue -------------------------------------

def pack_conv_weight(w):
    """PyTorch conv weight (Cout, Cin, 3, 3) -> (4, 4*Cin, Cout) per-cell matrices.

    Cell (a, b) in {0,1}^2 has rows indexed by (dh, dw, cin) and holds the tap
    (kh, kw) = (2a+dh, 2b+dw) of the 3x3 stencil; taps outside the stencil become zero rows.
    Do this once at parameter-prep time (not per forward call).
    """
    cout, cin, _, _ = w.shape
    wk = jnp.transpose(w, (2, 3, 1, 0))                           # (kh, kw, cin, cout)
    cells = []
    for a in range(2):
        for b in range(2):
            rows = []
            for dh in range(2):
                for dw in range(2):
                    kh, kw = 2 * a + dh, 2 * b + dw
                    if kh < 3 and kw < 3:
                        rows.append(wk[kh, kw])                   # (cin, cout)
                    else:
                        rows.append(jnp.zeros((cin, cout), w.dtype))
            cells.append(jnp.concatenate(rows, axis=0))           # (4*cin, cout)
    return jnp.stack(cells, axis=0)                               # (4, 4*cin, cout)


def downsample_forward(x, w_cells, bias):
    """Forward of Downsample: F.pad(x, (0, 1, 0, 1)) then Conv2d(k=3, s=2, p=0).

    x:       (B, C, H, W) float32 (NCHW, as in the PyTorch module).
    w_cells: (4, 4*C, Cout) pre-packed conv weight (see pack_conv_weight).
    bias:    (Cout,)
    Returns (B, Cout, Ho, Wo) with Ho = (H - 2) // 2 + 1, Wo likewise.
    """
    B, C, H, W = x.shape
    Cout = w_cells.shape[-1]
    Ho = (H + 1 - 3) // 2 + 1
    Wo = (W + 1 - 3) // 2 + 1
    Hs, Ws = Ho + 1, Wo + 1

    # Zero-pad bottom/right (covers F.pad's (0,1,0,1) plus an even-ing row/col that no valid tap
    # ever reads) and re-lay out as a space-to-depth cell grid with channels on the lane axis:
    #   xs[b, i, j, (2*dh + dw)*C + c] = xpad[b, c, 2*i + dh, 2*j + dw]
    xpad = jnp.pad(x, ((0, 0), (0, 0), (0, 2 * Hs - H), (0, 2 * Ws - W)))
    xs = xpad.reshape(B, C, Hs, 2, Ws, 2)
    xs = jnp.transpose(xs, (0, 2, 4, 3, 5, 1)).reshape(B, Hs, Ws, 4 * C)

    kernel = _make_downsample_kernel(Ho, Wo, Cout)
    # TODO(synk): for large spatial sizes, additionally tile the grid over output-row blocks
    # instead of processing one whole image per grid step.
    out = pl.pallas_call(
        kernel,
        out_shape=jax.ShapeDtypeStruct((B, Ho, Wo, Cout), jnp.float32),
        grid=(B,),
        in_specs=[
            pl.BlockSpec((1, Hs, Ws, 4 * C), lambda i: (i, 0, 0, 0)),   # one image's cell grid
            pl.BlockSpec((4, 4 * C, Cout), lambda i: (0, 0, 0)),        # weights (resident)
            pl.BlockSpec((1, 1, Cout), lambda i: (0, 0, 0)),            # bias (resident)
        ],
        out_specs=pl.BlockSpec((1, Ho, Wo, Cout), lambda i: (i, 0, 0, 0)),
        compiler_params=pltpu.CompilerParams(dimension_semantics=("parallel",)),
    )(xs, w_cells, bias.reshape(1, 1, Cout))

    return jnp.transpose(out, (0, 3, 1, 2))                       # NHWC -> NCHW


# ---------------------------------------- main ------------------------------------------

if __name__ == "__main__":
    B, C, H, W = 2, 4, 16, 16

    key = jax.random.PRNGKey(0)
    kx, kw, kb = jax.random.split(key, 3)

    x = jax.random.normal(kx, (B, C, H, W), jnp.float32)

    # Conv2d default init (uniform in +/- 1/sqrt(fan_in)), PyTorch weight layout (Cout, Cin, 3, 3).
    fan_in = C * 3 * 3
    bound = 1.0 / math.sqrt(fan_in)
    w = jax.random.uniform(kw, (C, C, 3, 3), jnp.float32, -bound, bound)
    b = jax.random.uniform(kb, (C,), jnp.float32, -bound, bound)

    w_cells = pack_conv_weight(w)                                 # param-prep-time packing

    fwd = jax.jit(downsample_forward)
    out = jax.block_until_ready(fwd(x, w_cells, b))

    Ho = (H + 1 - 3) // 2 + 1
    Wo = (W + 1 - 3) // 2 + 1
    assert out.shape == (B, C, Ho, Wo), out.shape
    assert bool(jnp.all(jnp.isfinite(out)))

    # Reference: exact PyTorch semantics (pad right/bottom by 1, 3x3 conv, stride 2, no conv pad).
    ref = lax.conv_general_dilated(
        x, w, window_strides=(2, 2), padding=((0, 1), (0, 1)),
        dimension_numbers=("NCHW", "OIHW", "NCHW"),
        precision=lax.Precision.HIGHEST,
    ) + b[None, :, None, None]
    err = float(jnp.max(jnp.abs(out - ref)))
    assert bool(jnp.allclose(out, ref, rtol=1e-4, atol=1e-4)), err

    print("KERNEL_OK")
</pallas_src>

<mosaic_0001>
module attributes {stable_mosaic.version = 11 : i64} {
  func.func @kernel(%arg0: i32, %arg1: memref<1x9x9x16xf32, #tpu.memory_space<vmem>>, %arg2: memref<4x16x4xf32, #tpu.memory_space<vmem>>, %arg3: memref<1x1x4xf32, #tpu.memory_space<vmem>>, %arg4: memref<1x8x8x4xf32, #tpu.memory_space<vmem>>) attributes {dimension_semantics = [#tpu.dimension_semantics<parallel>], iteration_bounds = array<i64: 2>, scalar_prefetch = 0 : i64, scratch_operands = 0 : i64, tpu.core_type = #tpu.core_type<tc>, window_params = [{transform_indices = @transform_0, window_bounds = array<i64: 1, 9, 9, 16>}, {pipeline_mode = #tpu.pipeline_mode<synchronous>, transform_indices = @transform_1, window_bounds = array<i64: 4, 16, 4>}, {pipeline_mode = #tpu.pipeline_mode<synchronous>, transform_indices = @transform_2, window_bounds = array<i64: 1, 1, 4>}, {transform_indices = @transform_3, window_bounds = array<i64: 1, 8, 8, 4>}]} {
    %c0 = arith.constant 0 : index
    %c0_0 = arith.constant 0 : index
    %c0_1 = arith.constant 0 : index
    %c0_2 = arith.constant 0 : index
    %0 = vector.load %arg1[%c0, %c0_0, %c0_1, %c0_2] : memref<1x9x9x16xf32, #tpu.memory_space<vmem>>, vector<1x9x9x16xf32>
    %1 = vector.shape_cast %0 : vector<1x9x9x16xf32> to vector<9x9x16xf32>
    %cst = arith.constant 0.000000e+00 : f32
    %2 = vector.broadcast %cst : f32 to vector<8x8x4xf32>
    %3 = vector.extract_strided_slice %1 {offsets = [0, 0, 0], sizes = [8, 8, 16], strides = [1, 1, 1]} : vector<9x9x16xf32> to vector<8x8x16xf32>
    %c0_3 = arith.constant 0 : index
    %c0_4 = arith.constant 0 : index
    %c0_5 = arith.constant 0 : index
    %4 = vector.load %arg2[%c0_3, %c0_4, %c0_5] : memref<4x16x4xf32, #tpu.memory_space<vmem>>, vector<1x16x4xf32>
    %5 = vector.shape_cast %4 : vector<1x16x4xf32> to vector<16x4xf32>
    %6 = vector.shape_cast %5 : vector<16x4xf32> to vector<1x16x4xf32>
    %7 = vector.broadcast %6 : vector<1x16x4xf32> to vector<8x16x4xf32>
    "tpu.trace_start"() <{level = 10 : i32, message = "hwk,hkc->hwc"}> : () -> ()
    %cst_6 = arith.constant dense<0.000000e+00> : vector<8x8x4xf32>
    %8 = tpu.matmul %3, %7, %cst_6 {dimension_numbers = #tpu.dot_dimension_numbers<[2], [1], [1], [2], [0, 0, 0, 1, 1, 2], [0], [0]>} : vector<8x8x16xf32>, vector<8x16x4xf32>, vector<8x8x4xf32> -> vector<8x8x4xf32>
    "tpu.trace_stop"() : () -> ()
    %9 = arith.addf %2, %8 : vector<8x8x4xf32>
    %10 = vector.extract_strided_slice %1 {offsets = [0, 1, 0], sizes = [8, 8, 16], strides = [1, 1, 1]} : vector<9x9x16xf32> to vector<8x8x16xf32>
    %c1 = arith.constant 1 : index
    %c0_7 = arith.constant 0 : index
    %c0_8 = arith.constant 0 : index
    %11 = vector.load %arg2[%c1, %c0_7, %c0_8] : memref<4x16x4xf32, #tpu.memory_space<vmem>>, vector<1x16x4xf32>
    %12 = vector.shape_cast %11 : vector<1x16x4xf32> to vector<16x4xf32>
    %13 = vector.shape_cast %12 : vector<16x4xf32> to vector<1x16x4xf32>
    %14 = vector.broadcast %13 : vector<1x16x4xf32> to vector<8x16x4xf32>
    "tpu.trace_start"() <{level = 10 : i32, message = "hwk,hkc->hwc"}> : () -> ()
    %cst_9 = arith.constant dense<0.000000e+00> : vector<8x8x4xf32>
    %15 = tpu.matmul %10, %14, %cst_9 {dimension_numbers = #tpu.dot_dimension_numbers<[2], [1], [1], [2], [0, 0, 0, 1, 1, 2], [0], [0]>} : vector<8x8x16xf32>, vector<8x16x4xf32>, vector<8x8x4xf32> -> vector<8x8x4xf32>
    "tpu.trace_stop"() : () -> ()
    %16 = arith.addf %9, %15 : vector<8x8x4xf32>
    %17 = vector.extract_strided_slice %1 {offsets = [1, 0, 0], sizes = [8, 8, 16], strides = [1, 1, 1]} : vector<9x9x16xf32> to vector<8x8x16xf32>
    %c2 = arith.constant 2 : index
    %c0_10 = arith.constant 0 : index
    %c0_11 = arith.constant 0 : index
    %18 = vector.load %arg2[%c2, %c0_10, %c0_11] : memref<4x16x4xf32, #tpu.memory_space<vmem>>, vector<1x16x4xf32>
    %19 = vector.shape_cast %18 : vector<1x16x4xf32> to vector<16x4xf32>
    %20 = vector.shape_cast %19 : vector<16x4xf32> to vector<1x16x4xf32>
    %21 = vector.broadcast %20 : vector<1x16x4xf32> to vector<8x16x4xf32>
    "tpu.trace_start"() <{level = 10 : i32, message = "hwk,hkc->hwc"}> : () -> ()
    %cst_12 = arith.constant dense<0.000000e+00> : vector<8x8x4xf32>
    %22 = tpu.matmul %17, %21, %cst_12 {dimension_numbers = #tpu.dot_dimension_numbers<[2], [1], [1], [2], [0, 0, 0, 1, 1, 2], [0], [0]>} : vector<8x8x16xf32>, vector<8x16x4xf32>, vector<8x8x4xf32> -> vector<8x8x4xf32>
    "tpu.trace_stop"() : () -> ()
    %23 = arith.addf %16, %22 : vector<8x8x4xf32>
    %24 = vector.extract_strided_slice %1 {offsets = [1, 1, 0], sizes = [8, 8, 16], strides = [1, 1, 1]} : vector<9x9x16xf32> to vector<8x8x16xf32>
    %c3 = arith.constant 3 : index
    %c0_13 = arith.constant 0 : index
    %c0_14 = arith.constant 0 : index
    %25 = vector.load %arg2[%c3, %c0_13, %c0_14] : memref<4x16x4xf32, #tpu.memory_space<vmem>>, vector<1x16x4xf32>
    %26 = vector.shape_cast %25 : vector<1x16x4xf32> to vector<16x4xf32>
    %27 = vector.shape_cast %26 : vector<16x4xf32> to vector<1x16x4xf32>
    %28 = vector.broadcast %27 : vector<1x16x4xf32> to vector<8x16x4xf32>
    "tpu.trace_start"() <{level = 10 : i32, message = "hwk,hkc->hwc"}> : () -> ()
    %cst_15 = arith.constant dense<0.000000e+00> : vector<8x8x4xf32>
    %29 = tpu.matmul %24, %28, %cst_15 {dimension_numbers = #tpu.dot_dimension_numbers<[2], [1], [1], [2], [0, 0, 0, 1, 1, 2], [0], [0]>} : vector<8x8x16xf32>, vector<8x16x4xf32>, vector<8x8x4xf32> -> vector<8x8x4xf32>
    "tpu.trace_stop"() : () -> ()
    %30 = arith.addf %23, %29 : vector<8x8x4xf32>
    %c0_16 = arith.constant 0 : index
    %c0_17 = arith.constant 0 : index
    %c0_18 = arith.constant 0 : index
    %31 = vector.load %arg3[%c0_16, %c0_17, %c0_18] : memref<1x1x4xf32, #tpu.memory_space<vmem>>, vector<1x1x4xf32>
    %32 = vector.broadcast %31 : vector<1x1x4xf32> to vector<8x8x4xf32>
    %33 = arith.addf %30, %32 : vector<8x8x4xf32>
    %c0_19 = arith.constant 0 : index
    %c0_20 = arith.constant 0 : index
    %c0_21 = arith.constant 0 : index
    %c0_22 = arith.constant 0 : index
    %34 = vector.load %arg4[%c0_19, %c0_20, %c0_21, %c0_22] : memref<1x8x8x4xf32, #tpu.memory_space<vmem>>, vector<1x8x8x4xf32>
    %35 = vector.shape_cast %34 : vector<1x8x8x4xf32> to vector<8x8x4xf32>
    %36 = vector.shape_cast %33 : vector<8x8x4xf32> to vector<1x8x8x4xf32>
    tpu.vector_store %arg4[%c0_19, %c0_20, %c0_21, %c0_22], %36 {strides = array<i32>} : memref<1x8x8x4xf32, #tpu.memory_space<vmem>>, vector<1x8x8x4xf32>,
    return
  }
  func.func @transform_0(%arg0: i32) -> (i32, i32, i32, i32) {
    %c0_i32 = arith.constant 0 : i32
    %c0_i32_0 = arith.constant 0 : i32
    %c0_i32_1 = arith.constant 0 : i32
    %c0_i32_2 = arith.constant 0 : i32
    return %arg0, %c0_i32, %c0_i32_0, %c0_i32_1 : i32, i32, i32, i32
  }
  func.func @transform_1(%arg0: i32) -> (i32, i32, i32) {
    %c0_i32 = arith.constant 0 : i32
    %c0_i32_0 = arith.constant 0 : i32
    %c0_i32_1 = arith.constant 0 : i32
    %c0_i32_2 = arith.constant 0 : i32
    return %c0_i32, %c0_i32_0, %c0_i32_1 : i32, i32, i32
  }
  func.func @transform_2(%arg0: i32) -> (i32, i32, i32) {
    %c0_i32 = arith.constant 0 : i32
    %c0_i32_0 = arith.constant 0 : i32
    %c0_i32_1 = arith.constant 0 : i32
    %c0_i32_2 = arith.constant 0 : i32
    return %c0_i32, %c0_i32_0, %c0_i32_1 : i32, i32, i32
  }
  func.func @transform_3(%arg0: i32) -> (i32, i32, i32, i32) {
    %c0_i32 = arith.constant 0 : i32
    %c0_i32_0 = arith.constant 0 : i32
    %c0_i32_1 = arith.constant 0 : i32
    %c0_i32_2 = arith.constant 0 : i32
    return %arg0, %c0_i32, %c0_i32_0, %c0_i32_1 : i32, i32, i32, i32
  }
}

</mosaic_0001>

<llo_original>
// kernel: downsample_forward.1
$region0: #{downsample_forward.1}
  #allocation0 [shape = 'u32[]', space=smem, size = 0x4, offset = 0x4, fixed_abs, tag = 'smem constant byte address 0x4 - core index']
  #allocation1 [shape = 'u32[144,128]{1,0:T(1,128)}', space=vmem, size = 0x12000, scoped, tag = 'internal scratch']
  %s0 = inlined_call_operand.vmem [shape: f32[2,9,9,16], index: 0, kind: input, shape index: {}]
  %s1 = inlined_call_operand.vmem [shape: f32[4,16,4], index: 1, kind: input, shape index: {}]
  %s2 = inlined_call_operand.vmem [shape: f32[1,1,4], index: 2, kind: input, shape index: {}]
  %s3 = inlined_call_operand.vmem [shape: f32[2,8,8,4], index: 3, kind: output, shape index: {}]
  %s4 = sld [smem:[#allocation0]]
  $region45: #{downsample_forward.1} parent=0
    _
  %s6 = ssub.s32 1, %s4
  %s7 = scalar_select 0, %s6, %s4
  loop: start=0, step=1, limit=4
  $region2: #{downsample_forward.1} parent=0 // loop_pre_header
    _
  $region3: #{downsample_forward.1} parent=0 // loop_header
    %s9 = sphi 0, %s13
    %p10 = scmp.ge.s32.totalorder %s9, 4
    %s19 = sphi 0, %s21
    %s22 = sphi 0, %s19
    %s23 = sphi 0, %s22
    %s39 = sphi 0, %s23
    %s43 = sphi 0, %s43
    %s45 = sphi 0, %s43
    %s46 = sphi 0, %s45
    %s60 = sphi 0, %s46
    %s64 = sphi 0, %s64
    %s66 = sphi 0, %s64
    %s67 = sphi 0, %s66
    %s81 = sphi 0, %s67
    %s87 = sphi 0, %s89
    %s90 = sphi 0, %s87
    %s91 = sphi 0, %s90
    %s107 = sphi 0, %s91
  $region4: #{downsample_forward.1} parent=0 // loop_header_branch
    %12 = sbr.rel (%p10) target = $region8
  $region5: #{downsample_forward.1} parent=0 // loop_body
    %s14 = ssub.s32 %s9, 1
    %s15 = ssub.s32 %s9, 2
    %s16 = sadd.s32 %s9, 1
    %s17 = ssub.s32 %s9, %s16
    %p18 = scmp.eq.s32.totalorder %s17, 0
    %s20 = sadd.s32 %s19, 1
    %s21 = scalar_select %p18, %s19, %s20
    %p24 = pneg %p18
    %p25 = scmp.eq.s32.totalorder %s9, 1
    %p26 = por %p24, %p25
    %p27 = scmp.ne.s32.totalorder %s19, %s22
    %p28 = scmp.eq.s32.totalorder %s9, 0
    %p29 = por %p27, %p28
    %p30 = scmp.ne.s32.totalorder %s19, %s22
    %p31 = scmp.eq.s32.totalorder %s14, 1
    %p32 = por %p30, %p31
    %p33 = scmp.ne.s32.totalorder %s22, %s23
    %p34 = scmp.eq.s32.totalorder %s14, 0
    %p35 = por %p33, %p34
    %p36 = scmp.ne.s32.totalorder %s22, %s23
    %p37 = scmp.eq.s32.totalorder %s15, 1
    %p38 = por %p36, %p37
    %p40 = scmp.ne.s32.totalorder %s23, %s39
    %p41 = scmp.eq.s32.totalorder %s15, 0
    %p42 = por %p40, %p41
    %s44 = sadd.s32 %s43, 1
    %p47 = scmp.eq.s32.totalorder %s9, 1
    %p48 = scmp.ne.s32.totalorder %s43, %s45
    %p49 = scmp.eq.s32.totalorder %s9, 0
    %p50 = por %p48, %p49
    %p51 = scmp.ne.s32.totalorder %s43, %s45
    %p52 = scmp.eq.s32.totalorder %s14, 1
    %p53 = por %p51, %p52
    %p54 = scmp.ne.s32.totalorder %s45, %s46
    %p55 = scmp.eq.s32.totalorder %s14, 0
    %p56 = por %p54, %p55
    %p57 = scmp.ne.s32.totalorder %s45, %s46
    %p58 = scmp.eq.s32.totalorder %s15, 1
    %p59 = por %p57, %p58
    %p61 = scmp.ne.s32.totalorder %s46, %s60
    %p62 = scmp.eq.s32.totalorder %s15, 0
    %p63 = por %p61, %p62
    %s65 = sadd.s32 %s64, 1
    %p68 = scmp.eq.s32.totalorder %s9, 1
    %p69 = scmp.ne.s32.totalorder %s64, %s66
    %p70 = scmp.eq.s32.totalorder %s9, 0
    %p71 = por %p69, %p70
    %p72 = scmp.ne.s32.totalorder %s64, %s66
    %p73 = scmp.eq.s32.totalorder %s14, 1
    %p74 = por %p72, %p73
    %p75 = scmp.ne.s32.totalorder %s66, %s67
    %p76 = scmp.eq.s32.totalorder %s14, 0
    %p77 = por %p75, %p76
    %p78 = scmp.ne.s32.totalorder %s66, %s67
    %p79 = scmp.eq.s32.totalorder %s15, 1
    %p80 = por %p78, %p79
    %p82 = scmp.ne.s32.totalorder %s67, %s81
    %p83 = scmp.eq.s32.totalorder %s15, 0
    %p84 = por %p82, %p83
    %s85 = ssub.s32 %s9, %s16
    %p86 = scmp.eq.s32.totalorder %s85, 0
    %s88 = sadd.s32 %s87, 1
    %s89 = scalar_select %p86, %s87, %s88
    %p92 = pneg %p86
    %p93 = scmp.eq.s32.totalorder %s9, 1
    %p94 = por %p92, %p93
    %p95 = scmp.ne.s32.totalorder %s87, %s90
    %p96 = scmp.eq.s32.totalorder %s9, 0
    %p97 = por %p95, %p96
    %p98 = scmp.ne.s32.totalorder %s87, %s90
    %p99 = scmp.eq.s32.totalorder %s14, 1
    %p100 = por %p98, %p99
    %p101 = scmp.ne.s32.totalorder %s90, %s91
    %p102 = scmp.eq.s32.totalorder %s14, 0
    %p103 = por %p101, %p102
    %p104 = scmp.ne.s32.totalorder %s90, %s91
    %p105 = scmp.eq.s32.totalorder %s15, 1
    %p106 = por %p104, %p105
    %p108 = scmp.ne.s32.totalorder %s91, %s107
    %p109 = scmp.eq.s32.totalorder %s15, 0
    %p110 = por %p108, %p109
    %p111 = scmp.le.s32.totalorder 1, %s9
    %p112 = scmp.lt.s32.totalorder %s9, 3
    %p113 = pnand %p111, %p112
    %p114 = pneg %p113
    // Predicated region
    $region9: #{downsample_forward.1} parent=5 // pred_check
      _
    $region10: #{downsample_forward.1} parent=5 // pred_check_branch
      %116 = sbr.rel (%p113) target = $region12
    $region11: #{downsample_forward.1} parent=5 // pred_region
      %s117 = ssub.s32 %s9, 1
      // Predicated region
      $region13: #{downsample_forward.1} parent=11 // pred_check
        %p118 = pneg %p56
      $region14: #{downsample_forward.1} parent=11 // pred_check_branch
        %120 = sbr.rel (%p118) target = $region16
      $region15: #{downsample_forward.1} parent=11 // pred_region
        _
      $region16: #{downsample_forward.1} parent=11 // pred_fallthru
        _
      // Predicated region
      $region17: #{downsample_forward.1} parent=11 // pred_check
        %p121 = pneg %p77
      $region18: #{downsample_forward.1} parent=11 // pred_check_branch
        %123 = sbr.rel (%p121) target = $region20
      $region19: #{downsample_forward.1} parent=11 // pred_region
        _
      $region20: #{downsample_forward.1} parent=11 // pred_fallthru
        _
    $region12: #{downsample_forward.1} parent=5 // pred_fallthru
      _
    %p124 = scmp.lt.s32.totalorder %s9, 2
    // Predicated region
    $region21: #{downsample_forward.1} parent=5 // pred_check
      %p125 = pneg %p124
    $region22: #{downsample_forward.1} parent=5 // pred_check_branch
      %127 = sbr.rel (%p125) target = $region24
    $region23: #{downsample_forward.1} parent=5 // pred_region
      // Predicated region
      $region25: #{downsample_forward.1} parent=23 // pred_check
        %p128 = pneg %p29
      $region26: #{downsample_forward.1} parent=23 // pred_check_branch
        %130 = sbr.rel (%p128) target = $region28
      $region27: #{downsample_forward.1} parent=23 // pred_region
        %p131 = scmp.lt.s32.totalorder %s9, 1
        %s132 = scalar_select %p131, %s9, 1
        %s133 = smul.addr %s132, 18
        %s134 = smul.addr %s133, 8
        %s135 = scalar_lea.vmem %s0, %s134
      $region28: #{downsample_forward.1} parent=23 // pred_fallthru
        _
    $region24: #{downsample_forward.1} parent=5 // pred_fallthru
      _
    %p136 = scmp.le.s32.totalorder 1, %s9
    %p137 = scmp.lt.s32.totalorder %s9, 3
    %p138 = pnand %p136, %p137
    %p139 = pneg %p138
    // Predicated region
    $region29: #{downsample_forward.1} parent=5 // pred_check
      _
    $region30: #{downsample_forward.1} parent=5 // pred_check_branch
      %141 = sbr.rel (%p138) target = $region32
    $region31: #{downsample_forward.1} parent=5 // pred_region
      %s142 = ssub.s32 %s9, 1
      %p143 = scmp.lt.s32.totalorder %s14, 1
      %s144 = scalar_select %p143, %s14, 1
      %s145 = smul.addr %s144, 18
      %s146 = smul.addr %s145, 8
      %s147 = scalar_lea.vmem %s0, %s146
      %p148 = pneg %p35
      %p149 = pneg %p32
      %p150 = pneg %p56
      %p151 = pneg %p53
      %p152 = pneg %p77
      %p153 = pneg %p74
      %p154 = pneg %p103
      %p155 = pneg %p100
      %p156 = scmp.lt.s32.totalorder %s14, 1
      %s157 = scalar_select %p156, %s14, 1
      %s158 = smul.addr %s157, 8
      %s159 = smul.addr %s158, 8
      %s160 = scalar_lea.vmem %s3, %s159
      %p161 = scmp.lt.s32.totalorder %s14, 1
      %s162 = scalar_select %p161, %s14, 1
      %s163 = smul.addr %s162, 18
      %s164 = smul.addr %s163, 8
      %s165 = scalar_lea.vmem %s0, %s164
      %p166 = scmp.lt.s32.totalorder %s14, 1
      %s167 = scalar_select %p166, %s14, 1
      %s168 = smul.addr %s167, 8
      %s169 = smul.addr %s168, 8
      %s170 = scalar_lea.vmem %s3, %s169
      %v171 = vld [vmem:[%s165] sm:$0xff]
      %v172 = vld [vmem:[%s165 + $0x8] sm:$0x1]
      %v173 = vld [vmem:[%s165 + $0x10] sm:$0xff]
      %v174 = vld [vmem:[%s165 + $0x18] sm:$0x1]
      %v175 = vld [vmem:[%s165 + $0x20] sm:$0xff]
      %v176 = vld [vmem:[%s165 + $0x28] sm:$0x1]
      %v177 = vld [vmem:[%s165 + $0x30] sm:$0xff]
      %v178 = vld [vmem:[%s165 + $0x38] sm:$0x1]
      %v179 = vld [vmem:[%s165 + $0x40] sm:$0xff]
      %v180 = vld [vmem:[%s165 + $0x48] sm:$0x1]
      %v181 = vld [vmem:[%s165 + $0x50] sm:$0xff]
      %v182 = vld [vmem:[%s165 + $0x58] sm:$0x1]
      %v183 = vld [vmem:[%s165 + $0x60] sm:$0xff]
      %v184 = vld [vmem:[%s165 + $0x68] sm:$0x1]
      %v185 = vld [vmem:[%s165 + $0x70] sm:$0xff]
      %v186 = vld [vmem:[%s165 + $0x78] sm:$0x1]
      %v187 = vld [vmem:[%s165 + $0x80] sm:$0xff]
      %v188 = vld [vmem:[%s165 + $0x88] sm:$0x1]
      %v189 = vld [vmem:[%s1] sm:$0xff]
      %v190 = vld [vmem:[%s1 + $0x8] sm:$0xff]
      %s191 = scalar_lea.vmem %s1, 16
      %v192 = vld [vmem:[%s191] sm:$0xff]
      %v193 = vld [vmem:[%s191 + $0x8] sm:$0xff]
      %vm196 = vcmask 1046528
      %v197 = vrot.slane %v171, 1
      %v198 = vrot.slane %v172, 1
      %v199 = vsel %vm196, %v197, %v198
      %vm200 = vcmask 130048
      %v201 = vsel %vm200, %v199, 0
      %203 = vmatprep.subr.mxu0 0.0
      %204 = vmatpush1.msra.mxu0 %v192
      %205 = vmatprep.subr.mxu0 0.0
      %206 = vmatpush1.msra.mxu0 %v193
      %207 = vmatprep.subr.mxu0 0.0
      %208 = vmatpush1.msra.mxu0 0.0
      %209 = vmatprep.subr.mxu0 0.0
      %210 = vmatpush1.msra.mxu0 0.0
      %211 = vmatprep.subr.mxu0 0.0
      %212 = vmatpush1.msra.mxu0 0.0
      %213 = vmatprep.subr.mxu0 0.0
      %214 = vmatpush1.msra.mxu0 0.0
      %215 = vmatprep.subr.mxu0 0.0
      %216 = vmatpush1.msra.mxu0 0.0
      %217 = vmatprep.subr.mxu0 0.0
      %218 = vmatpush1.msra.mxu0 0.0
      %219 = vmatprep.subr.mxu0 0.0
      %220 = vmatpush1.msra.mxu0 0.0
      %221 = vmatprep.subr.mxu0 0.0
      %222 = vmatpush1.msra.mxu0 0.0
      %223 = vmatprep.subr.mxu0 0.0
      %224 = vmatpush1.msra.mxu0 0.0
      %225 = vmatprep.subr.mxu0 0.0
      %226 = vmatpush1.msra.mxu0 0.0
      %227 = vmatprep.subr.mxu0 0.0
      %228 = vmatpush1.msra.mxu0 0.0
      %229 = vmatprep.subr.mxu0 0.0
      %230 = vmatpush1.msra.mxu0 0.0
      %231 = vmatprep.subr.mxu0 0.0
      %232 = vmatpush1.msra.mxu0 0.0
      %233 = vmatprep.subr.mxu0 0.0
      %234 = vmatpush1.msra.mxu0 0.0
      %235 = vmatprep.subr.mxu0 0.0
      %236 = vmatpush1.msra.mxu0 0.0
      %237 = vmatprep.subr.mxu0 0.0
      %238 = vmatpush1.msra.mxu0 0.0
      %239 = vmatprep.subr.mxu0 0.0
      %240 = vmatpush1.msra.mxu0 0.0
      %241 = vmatprep.subr.mxu0 0.0
      %242 = vmatpush1.msra.mxu0 0.0
      %243 = vmatprep.subr.mxu0 0.0
      %244 = vmatpush1.msra.mxu0 0.0
      %245 = vmatprep.subr.mxu0 0.0
      %246 = vmatpush1.msra.mxu0 0.0
      %247 = vmatprep.subr.mxu0 0.0
      %248 = vmatpush1.msra.mxu0 0.0
      %249 = vmatprep.subr.mxu0 0.0
      %250 = vmatpush1.msra.mxu0 0.0
      %251 = vmatprep.subr.mxu0 0.0
      %252 = vmatpush1.msra.mxu0 0.0
      %253 = vmatprep.subr.mxu0 0.0
      %254 = vmatpush1.msra.mxu0 0.0
      %255 = vmatprep.subr.mxu0 0.0
      %256 = vmatpush1.msra.mxu0 0.0
      %257 = vmatprep.subr.mxu0 0.0
      %258 = vmatpush1.msra.mxu0 0.0
      %259 = vmatprep.subr.mxu0 0.0
      %260 = vmatpush1.msra.mxu0 0.0
      %261 = vmatprep.subr.mxu0 0.0
      %262 = vmatpush1.msra.mxu0 0.0
      %263 = vmatprep.subr.mxu0 0.0
      %264 = vmatpush1.msra.mxu0 0.0
      %265 = vmatprep.subr.mxu0 0.0
      %266 = vmatpush1.msra.mxu0 0.0
      %267 = vmatprep.mubr.f32.mxu0 0.0
      %268 = vmatmul.mubr.f32.gmra.mrb[0].mxu0 %v201
      %v269 = vpop.f32.mrb[0].mxu0
      %v270 = vadd.f32 0.0, %v269
      %v271 = vpop.f32.mrb[0].mxu0
      %272 = vdwg.mxu0
      %v275 = vrot.slane %v173, 1
      %v276 = vrot.slane %v174, 1
      %v277 = vsel %vm196, %v275, %v276
      %v278 = vsel %vm200, %v277, 0
      %280 = vmatprep.subr.mxu0 0.0
      %281 = vmatpush1.msra.mxu0 %v192
      %282 = vmatprep.subr.mxu0 0.0
      %283 = vmatpush1.msra.mxu0 %v193
      %284 = vmatprep.subr.mxu0 0.0
      %285 = vmatpush1.msra.mxu0 0.0
      %286 = vmatprep.subr.mxu0 0.0
      %287 = vmatpush1.msra.mxu0 0.0
      %288 = vmatprep.subr.mxu0 0.0
      %289 = vmatpush1.msra.mxu0 0.0
      %290 = vmatprep.subr.mxu0 0.0
      %291 = vmatpush1.msra.mxu0 0.0
      %292 = vmatprep.subr.mxu0 0.0
      %293 = vmatpush1.msra.mxu0 0.0
      %294 = vmatprep.subr.mxu0 0.0
      %295 = vmatpush1.msra.mxu0 0.0
      %296 = vmatprep.subr.mxu0 0.0
      %297 = vmatpush1.msra.mxu0 0.0
      %298 = vmatprep.subr.mxu0 0.0
      %299 = vmatpush1.msra.mxu0 0.0
      %300 = vmatprep.subr.mxu0 0.0
      %301 = vmatpush1.msra.mxu0 0.0
      %302 = vmatprep.subr.mxu0 0.0
      %303 = vmatpush1.msra.mxu0 0.0
      %304 = vmatprep.subr.mxu0 0.0
      %305 = vmatpush1.msra.mxu0 0.0
      %306 = vmatprep.subr.mxu0 0.0
      %307 = vmatpush1.msra.mxu0 0.0
      %308 = vmatprep.subr.mxu0 0.0
      %309 = vmatpush1.msra.mxu0 0.0
      %310 = vmatprep.subr.mxu0 0.0
      %311 = vmatpush1.msra.mxu0 0.0
      %312 = vmatprep.subr.mxu0 0.0
      %313 = vmatpush1.msra.mxu0 0.0
      %314 = vmatprep.subr.mxu0 0.0
      %315 = vmatpush1.msra.mxu0 0.0
      %316 = vmatprep.subr.mxu0 0.0
      %317 = vmatpush1.msra.mxu0 0.0
      %318 = vmatprep.subr.mxu0 0.0
      %319 = vmatpush1.msra.mxu0 0.0
      %320 = vmatprep.subr.mxu0 0.0
      %321 = vmatpush1.msra.mxu0 0.0
      %322 = vmatprep.subr.mxu0 0.0
      %323 = vmatpush1.msra.mxu0 0.0
      %324 = vmatprep.subr.mxu0 0.0
      %325 = vmatpush1.msra.mxu0 0.0
      %326 = vmatprep.subr.mxu0 0.0
      %327 = vmatpush1.msra.mxu0 0.0
      %328 = vmatprep.subr.mxu0 0.0
      %329 = vmatpush1.msra.mxu0 0.0
      %330 = vmatprep.subr.mxu0 0.0
      %331 = vmatpush1.msra.mxu0 0.0
      %332 = vmatprep.subr.mxu0 0.0
      %333 = vmatpush1.msra.mxu0 0.0
      %334 = vmatprep.subr.mxu0 0.0
      %335 = vmatpush1.msra.mxu0 0.0
      %336 = vmatprep.subr.mxu0 0.0
      %337 = vmatpush1.msra.mxu0 0.0
      %338 = vmatprep.subr.mxu0 0.0
      %339 = vmatpush1.msra.mxu0 0.0
      %340 = vmatprep.subr.mxu0 0.0
      %341 = vmatpush1.msra.mxu0 0.0
      %342 = vmatprep.subr.mxu0 0.0
      %343 = vmatpush1.msra.mxu0 0.0
      %344 = vmatprep.mubr.f32.mxu0 0.0
      %345 = vmatmul.mubr.f32.gmra.mrb[0].mxu0 %v278
      %v346 = vpop.f32.mrb[0].mxu0
      %v347 = vadd.f32 0.0, %v346
      %v348 = vpop.f32.mrb[0].mxu0
      %349 = vdwg.mxu0
      %v352 = vrot.slane %v175, 1
      %v353 = vrot.slane %v176, 1
      %v354 = vsel %vm196, %v352, %v353
      %v355 = vsel %vm200, %v354, 0
      %357 = vmatprep.subr.mxu0 0.0
      %358 = vmatpush1.msra.mxu0 %v192
      %359 = vmatprep.subr.mxu0 0.0
      %360 = vmatpush1.msra.mxu0 %v193
      %361 = vmatprep.subr.mxu0 0.0
      %362 = vmatpush1.msra.mxu0 0.0
      %363 = vmatprep.subr.mxu0 0.0
      %364 = vmatpush1.msra.mxu0 0.0
      %365 = vmatprep.subr.mxu0 0.0
      %366 = vmatpush1.msra.mxu0 0.0
      %367 = vmatprep.subr.mxu0 0.0
      %368 = vmatpush1.msra.mxu0 0.0
      %369 = vmatprep.subr.mxu0 0.0
      %370 = vmatpush1.msra.mxu0 0.0
      %371 = vmatprep.subr.mxu0 0.0
      %372 = vmatpush1.msra.mxu0 0.0
      %373 = vmatprep.subr.mxu0 0.0
      %374 = vmatpush1.msra.mxu0 0.0
      %375 = vmatprep.subr.mxu0 0.0
      %376 = vmatpush1.msra.mxu0 0.0
      %377 = vmatprep.subr.mxu0 0.0
      %378 = vmatpush1.msra.mxu0 0.0
      %379 = vmatprep.subr.mxu0 0.0
      %380 = vmatpush1.msra.mxu0 0.0
      %381 = vmatprep.subr.mxu0 0.0
      %382 = vmatpush1.msra.mxu0 0.0
      %383 = vmatprep.subr.mxu0 0.0
      %384 = vmatpush1.msra.mxu0 0.0
      %385 = vmatprep.subr.mxu0 0.0
      %386 = vmatpush1.msra.mxu0 0.0
      %387 = vmatprep.subr.mxu0 0.0
      %388 = vmatpush1.msra.mxu0 0.0
      %389 = vmatprep.subr.mxu0 0.0
      %390 = vmatpush1.msra.mxu0 0.0
      %391 = vmatprep.subr.mxu0 0.0
      %392 = vmatpush1.msra.mxu0 0.0
      %393 = vmatprep.subr.mxu0 0.0
      %394 = vmatpush1.msra.mxu0 0.0
      %395 = vmatprep.subr.mxu0 0.0
      %396 = vmatpush1.msra.mxu0 0.0
      %397 = vmatprep.subr.mxu0 0.0
      %398 = vmatpush1.msra.mxu0 0.0
      %399 = vmatprep.subr.mxu0 0.0
      %400 = vmatpush1.msra.mxu0 0.0
      %401 = vmatprep.subr.mxu0 0.0
      %402 = vmatpush1.msra.mxu0 0.0
      %403 = vmatprep.subr.mxu0 0.0
      %404 = vmatpush1.msra.mxu0 0.0
      %405 = vmatprep.subr.mxu0 0.0
      %406 = vmatpush1.msra.mxu0 0.0
      %407 = vmatprep.subr.mxu0 0.0
      %408 = vmatpush1.msra.mxu0 0.0
      %409 = vmatprep.subr.mxu0 0.0
      %410 = vmatpush1.msra.mxu0 0.0
      %411 = vmatprep.subr.mxu0 0.0
      %412 = vmatpush1.msra.mxu0 0.0
      %413 = vmatprep.subr.mxu0 0.0
      %414 = vmatpush1.msra.mxu0 0.0
      %415 = vmatprep.subr.mxu0 0.0
      %416 = vmatpush1.msra.mxu0 0.0
      %417 = vmatprep.subr.mxu0 0.0
      %418 = vmatpush1.msra.mxu0 0.0
      %419 = vmatprep.subr.mxu0 0.0
      %420 = vmatpush1.msra.mxu0 0.0
      %421 = vmatprep.mubr.f32.mxu0 0.0
      %422 = vmatmul.mubr.f32.gmra.mrb[0].mxu0 %v355
      %v423 = vpop.f32.mrb[0].mxu0
      %v424 = vadd.f32 0.0, %v423
      %v425 = vpop.f32.mrb[0].mxu0
      %426 = vdwg.mxu0
      %v429 = vrot.slane %v177, 1
      %v430 = vrot.slane %v178, 1
      %v431 = vsel %vm196, %v429, %v430
      %v432 = vsel %vm200, %v431, 0
      %434 = vmatprep.subr.mxu0 0.0
      %435 = vmatpush1.msra.mxu0 %v192
      %436 = vmatprep.subr.mxu0 0.0
      %437 = vmatpush1.msra.mxu0 %v193
      %438 = vmatprep.subr.mxu0 0.0
      %439 = vmatpush1.msra.mxu0 0.0
      %440 = vmatprep.subr.mxu0 0.0
      %441 = vmatpush1.msra.mxu0 0.0
      %442 = vmatprep.subr.mxu0 0.0
      %443 = vmatpush1.msra.mxu0 0.0
      %444 = vmatprep.subr.mxu0 0.0
      %445 = vmatpush1.msra.mxu0 0.0
      %446 = vmatprep.subr.mxu0 0.0
      %447 = vmatpush1.msra.mxu0 0.0
      %448 = vmatprep.subr.mxu0 0.0
      %449 = vmatpush1.msra.mxu0 0.0
      %450 = vmatprep.subr.mxu0 0.0
      %451 = vmatpush1.msra.mxu0 0.0
      %452 = vmatprep.subr.mxu0 0.0
      %453 = vmatpush1.msra.mxu0 0.0
      %454 = vmatprep.subr.mxu0 0.0
      %455 = vmatpush1.msra.mxu0 0.0
      %456 = vmatprep.subr.mxu0 0.0
      %457 = vmatpush1.msra.mxu0 0.0
      %458 = vmatprep.subr.mxu0 0.0
      %459 = vmatpush1.msra.mxu0 0.0
      %460 = vmatprep.subr.mxu0 0.0
      %461 = vmatpush1.msra.mxu0 0.0
      %462 = vmatprep.subr.mxu0 0.0
      %463 = vmatpush1.msra.mxu0 0.0
      %464 = vmatprep.subr.mxu0 0.0
      %465 = vmatpush1.msra.mxu0 0.0
      %466 = vmatprep.subr.mxu0 0.0
      %467 = vmatpush1.msra.mxu0 0.0
      %468 = vmatprep.subr.mxu0 0.0
      %469 = vmatpush1.msra.mxu0 0.0
      %470 = vmatprep.subr.mxu0 0.0
      %471 = vmatpush1.msra.mxu0 0.0
      %472 = vmatprep.subr.mxu0 0.0
      %473 = vmatpush1.msra.mxu0 0.0
      %474 = vmatprep.subr.mxu0 0.0
      %475 = vmatpush1.msra.mxu0 0.0
      %476 = vmatprep.subr.mxu0 0.0
      %477 = vmatpush1.msra.mxu0 0.0
      %478 = vmatprep.subr.mxu0 0.0
      %479 = vmatpush1.msra.mxu0 0.0
      %480 = vmatprep.subr.mxu0 0.0
      %481 = vmatpush1.msra.mxu0 0.0
      %482 = vmatprep.subr.mxu0 0.0
      %483 = vmatpush1.msra.mxu0 0.0
      %484 = vmatprep.subr.mxu0 0.0
      %485 = vmatpush1.msra.mxu0 0.0
      %486 = vmatprep.subr.mxu0 0.0
      %487 = vmatpush1.msra.mxu0 0.0
      %488 = vmatprep.subr.mxu0 0.0
      %489 = vmatpush1.msra.mxu0 0.0
      %490 = vmatprep.subr.mxu0 0.0
      %491 = vmatpush1.msra.mxu0 0.0
      %492 = vmatprep.subr.mxu0 0.0
      %493 = vmatpush1.msra.mxu0 0.0
      %494 = vmatprep.subr.mxu0 0.0
      %495 = vmatpush1.msra.mxu0 0.0
      %496 = vmatprep.subr.mxu0 0.0
      %497 = vmatpush1.msra.mxu0 0.0
      %498 = vmatprep.mubr.f32.mxu0 0.0
      %499 = vmatmul.mubr.f32.gmra.mrb[0].mxu0 %v432
      %v500 = vpop.f32.mrb[0].mxu0
      %v501 = vadd.f32 0.0, %v500
      %v502 = vpop.f32.mrb[0].mxu0
      %503 = vdwg.mxu0
      %v506 = vrot.slane %v179, 1
      %v507 = vrot.slane %v180, 1
      %v508 = vsel %vm196, %v506, %v507
      %v509 = vsel %vm200, %v508, 0
      %511 = vmatprep.subr.mxu0 0.0
      %512 = vmatpush1.msra.mxu0 %v192
      %513 = vmatprep.subr.mxu0 0.0
      %514 = vmatpush1.msra.mxu0 %v193
      %515 = vmatprep.subr.mxu0 0.0
      %516 = vmatpush1.msra.mxu0 0.0
      %517 = vmatprep.subr.mxu0 0.0
      %518 = vmatpush1.msra.mxu0 0.0
      %519 = vmatprep.subr.mxu0 0.0
      %520 = vmatpush1.msra.mxu0 0.0
      %521 = vmatprep.subr.mxu0 0.0
      %522 = vmatpush1.msra.mxu0 0.0
      %523 = vmatprep.subr.mxu0 0.0
      %524 = vmatpush1.msra.mxu0 0.0
      %525 = vmatprep.subr.mxu0 0.0
      %526 = vmatpush1.msra.mxu0 0.0
      %527 = vmatprep.subr.mxu0 0.0
      %528 = vmatpush1.msra.mxu0 0.0
      %529 = vmatprep.subr.mxu0 0.0
      %530 = vmatpush1.msra.mxu0 0.0
      %531 = vmatprep.subr.mxu0 0.0
      %532 = vmatpush1.msra.mxu0 0.0
      %533 = vmatprep.subr.mxu0 0.0
      %534 = vmatpush1.msra.mxu0 0.0
      %535 = vmatprep.subr.mxu0 0.0
      %536 = vmatpush1.msra.mxu0 0.0
      %537 = vmatprep.subr.mxu0 0.0
      %538 = vmatpush1.msra.mxu0 0.0
      %539 = vmatprep.subr.mxu0 0.0
      %540 = vmatpush1.msra.mxu0 0.0
      %541 = vmatprep.subr.mxu0 0.0
      %542 = vmatpush1.msra.mxu0 0.0
      %543 = vmatprep.subr.mxu0 0.0
      %544 = vmatpush1.msra.mxu0 0.0
      %545 = vmatprep.subr.mxu0 0.0
      %546 = vmatpush1.msra.mxu0 0.0
      %547 = vmatprep.subr.mxu0 0.0
      %548 = vmatpush1.msra.mxu0 0.0
      %549 = vmatprep.subr.mxu0 0.0
      %550 = vmatpush1.msra.mxu0 0.0
      %551 = vmatprep.subr.mxu0 0.0
      %552 = vmatpush1.msra.mxu0 0.0
      %553 = vmatprep.subr.mxu0 0.0
      %554 = vmatpush1.msra.mxu0 0.0
      %555 = vmatprep.subr.mxu0 0.0
      %556 = vmatpush1.msra.mxu0 0.0
      %557 = vmatprep.subr.mxu0 0.0
      %558 = vmatpush1.msra.mxu0 0.0
      %559 = vmatprep.subr.mxu0 0.0
      %560 = vmatpush1.msra.mxu0 0.0
      %561 = vmatprep.subr.mxu0 0.0
      %562 = vmatpush1.msra.mxu0 0.0
      %563 = vmatprep.subr.mxu0 0.0
      %564 = vmatpush1.msra.mxu0 0.0
      %565 = vmatprep.subr.mxu0 0.0
      %566 = vmatpush1.msra.mxu0 0.0
      %567 = vmatprep.subr.mxu0 0.0
      %568 = vmatpush1.msra.mxu0 0.0
      %569 = vmatprep.subr.mxu0 0.0
      %570 = vmatpush1.msra.mxu0 0.0
      %571 = vmatprep.subr.mxu0 0.0
      %572 = vmatpush1.msra.mxu0 0.0
      %573 = vmatprep.subr.mxu0 0.0
      %574 = vmatpush1.msra.mxu0 0.0
      %575 = vmatprep.mubr.f32.mxu0 0.0
      %576 = vmatmul.mubr.f32.gmra.mrb[0].mxu0 %v509
      %v577 = vpop.f32.mrb[0].mxu0
      %v578 = vadd.f32 0.0, %v577
      %v579 = vpop.f32.mrb[0].mxu0
      %580 = vdwg.mxu0
      %v583 = vrot.slane %v181, 1
      %v584 = vrot.slane %v182, 1
      %v585 = vsel %vm196, %v583, %v584
      %v586 = vsel %vm200, %v585, 0
      %588 = vmatprep.subr.mxu0 0.0
      %589 = vmatpush1.msra.mxu0 %v192
      %590 = vmatprep.subr.mxu0 0.0
      %591 = vmatpush1.msra.mxu0 %v193
      %592 = vmatprep.subr.mxu0 0.0
      %593 = vmatpush1.msra.mxu0 0.0
      %594 = vmatprep.subr.mxu0 0.0
      %595 = vmatpush1.msra.mxu0 0.0
      %596 = vmatprep.subr.mxu0 0.0
      %597 = vmatpush1.msra.mxu0 0.0
      %598 = vmatprep.subr.mxu0 0.0
      %599 = vmatpush1.msra.mxu0 0.0
      %600 = vmatprep.subr.mxu0 0.0
      %601 = vmatpush1.msra.mxu0 0.0
      %602 = vmatprep.subr.mxu0 0.0
      %603 = vmatpush1.msra.mxu0 0.0
      %604 = vmatprep.subr.mxu0 0.0
      %605 = vmatpush1.msra.mxu0 0.0
      %606 = vmatprep.subr.mxu0 0.0
      %607 = vmatpush1.msra.mxu0 0.0
      %608 = vmatprep.subr.mxu0 0.0
      %609 = vmatpush1.msra.mxu0 0.0
      %610 = vmatprep.subr.mxu0 0.0
      %611 = vmatpush1.msra.mxu0 0.0
      %612 = vmatprep.subr.mxu0 0.0
      %613 = vmatpush1.msra.mxu0 0.0
      %614 = vmatprep.subr.mxu0 0.0
      %615 = vmatpush1.msra.mxu0 0.0
      %616 = vmatprep.subr.mxu0 0.0
      %617 = vmatpush1.msra.mxu0 0.0
      %618 = vmatprep.subr.mxu0 0.0
      %619 = vmatpush1.msra.mxu0 0.0
      %620 = vmatprep.subr.mxu0 0.0
      %621 = vmatpush1.msra.mxu0 0.0
      %622 = vmatprep.subr.mxu0 0.0
      %623 = vmatpush1.msra.mxu0 0.0
      %624 = vmatprep.subr.mxu0 0.0
      %625 = vmatpush1.msra.mxu0 0.0
      %626 = vmatprep.subr.mxu0 0.0
      %627 = vmatpush1.msra.mxu0 0.0
      %628 = vmatprep.subr.mxu0 0.0
      %629 = vmatpush1.msra.mxu0 0.0
      %630 = vmatprep.subr.mxu0 0.0
      %631 = vmatpush1.msra.mxu0 0.0
      %632 = vmatprep.subr.mxu0 0.0
      %633 = vmatpush1.msra.mxu0 0.0
      %634 = vmatprep.subr.mxu0 0.0
      %635 = vmatpush1.msra.mxu0 0.0
      %636 = vmatprep.subr.mxu0 0.0
      %637 = vmatpush1.msra.mxu0 0.0
      %638 = vmatprep.subr.mxu0 0.0
      %639 = vmatpush1.msra.mxu0 0.0
      %640 = vmatprep.subr.mxu0 0.0
      %641 = vmatpush1.msra.mxu0 0.0
      %642 = vmatprep.subr.mxu0 0.0
      %643 = vmatpush1.msra.mxu0 0.0
      %644 = vmatprep.subr.mxu0 0.0
      %645 = vmatpush1.msra.mxu0 0.0
      %646 = vmatprep.subr.mxu0 0.0
      %647 = vmatpush1.msra.mxu0 0.0
      %648 = vmatprep.subr.mxu0 0.0
      %649 = vmatpush1.msra.mxu0 0.0
      %650 = vmatprep.subr.mxu0 0.0
      %651 = vmatpush1.msra.mxu0 0.0
      %652 = vmatprep.mubr.f32.mxu0 0.0
      %653 = vmatmul.mubr.f32.gmra.mrb[0].mxu0 %v586
      %v654 = vpop.f32.mrb[0].mxu0
      %v655 = vadd.f32 0.0, %v654
      %v656 = vpop.f32.mrb[0].mxu0
      %657 = vdwg.mxu0
      %v660 = vrot.slane %v183, 1
      %v661 = vrot.slane %v184, 1
      %v662 = vsel %vm196, %v660, %v661
      %v663 = vsel %vm200, %v662, 0
      %665 = vmatprep.subr.mxu0 0.0
      %666 = vmatpush1.msra.mxu0 %v192
      %667 = vmatprep.subr.mxu0 0.0
      %668 = vmatpush1.msra.mxu0 %v193
      %669 = vmatprep.subr.mxu0 0.0
      %670 = vmatpush1.msra.mxu0 0.0
      %671 = vmatprep.subr.mxu0 0.0
      %672 = vmatpush1.msra.mxu0 0.0
      %673 = vmatprep.subr.mxu0 0.0
      %674 = vmatpush1.msra.mxu0 0.0
      %675 = vmatprep.subr.mxu0 0.0
      %676 = vmatpush1.msra.mxu0 0.0
      %677 = vmatprep.subr.mxu0 0.0
      %678 = vmatpush1.msra.mxu0 0.0
      %679 = vmatprep.subr.mxu0 0.0
      %680 = vmatpush1.msra.mxu0 0.0
      %681 = vmatprep.subr.mxu0 0.0
      %682 = vmatpush1.msra.mxu0 0.0
      %683 = vmatprep.subr.mxu0 0.0
      %684 = vmatpush1.msra.mxu0 0.0
      %685 = vmatprep.subr.mxu0 0.0
      %686 = vmatpush1.msra.mxu0 0.0
      %687 = vmatprep.subr.mxu0 0.0
      %688 = vmatpush1.msra.mxu0 0.0
      %689 = vmatprep.subr.mxu0 0.0
      %690 = vmatpush1.msra.mxu0 0.0
      %691 = vmatprep.subr.mxu0 0.0
      %692 = vmatpush1.msra.mxu0 0.0
      %693 = vmatprep.subr.mxu0 0.0
      %694 = vmatpush1.msra.mxu0 0.0
      %695 = vmatprep.subr.mxu0 0.0
      %696 = vmatpush1.msra.mxu0 0.0
      %697 = vmatprep.subr.mxu0 0.0
      %698 = vmatpush1.msra.mxu0 0.0
      %699 = vmatprep.subr.mxu0 0.0
      %700 = vmatpush1.msra.mxu0 0.0
      %701 = vmatprep.subr.mxu0 0.0
      %702 = vmatpush1.msra.mxu0 0.0
      %703 = vmatprep.subr.mxu0 0.0
      %704 = vmatpush1.msra.mxu0 0.0
      %705 = vmatprep.subr.mxu0 0.0
      %706 = vmatpush1.msra.mxu0 0.0
      %707 = vmatprep.subr.mxu0 0.0
      %708 = vmatpush1.msra.mxu0 0.0
      %709 = vmatprep.subr.mxu0 0.0
      %710 = vmatpush1.msra.mxu0 0.0
      %711 = vmatprep.subr.mxu0 0.0
      %712 = vmatpush1.msra.mxu0 0.0
      %713 = vmatprep.subr.mxu0 0.0
      %714 = vmatpush1.msra.mxu0 0.0
      %715 = vmatprep.subr.mxu0 0.0
      %716 = vmatpush1.msra.mxu0 0.0
      %717 = vmatprep.subr.mxu0 0.0
      %718 = vmatpush1.msra.mxu0 0.0
      %719 = vmatprep.subr.mxu0 0.0
      %720 = vmatpush1.msra.mxu0 0.0
      %721 = vmatprep.subr.mxu0 0.0
      %722 = vmatpush1.msra.mxu0 0.0
      %723 = vmatprep.subr.mxu0 0.0
      %724 = vmatpush1.msra.mxu0 0.0
      %725 = vmatprep.subr.mxu0 0.0
      %726 = vmatpush1.msra.mxu0 0.0
      %727 = vmatprep.subr.mxu0 0.0
      %728 = vmatpush1.msra.mxu0 0.0
      %729 = vmatprep.mubr.f32.mxu0 0.0
      %730 = vmatmul.mubr.f32.gmra.mrb[0].mxu0 %v663
      %v731 = vpop.f32.mrb[0].mxu0
      %v732 = vadd.f32 0.0, %v731
      %v733 = vpop.f32.mrb[0].mxu0
      %734 = vdwg.mxu0
      %v737 = vrot.slane %v185, 1
      %v738 = vrot.slane %v186, 1
      %v739 = vsel %vm196, %v737, %v738
      %v740 = vsel %vm200, %v739, 0
      %742 = vmatprep.subr.mxu0 0.0
      %743 = vmatpush1.msra.mxu0 %v192
      %744 = vmatprep.subr.mxu0 0.0
      %745 = vmatpush1.msra.mxu0 %v193
      %746 = vmatprep.subr.mxu0 0.0
      %747 = vmatpush1.msra.mxu0 0.0
      %748 = vmatprep.subr.mxu0 0.0
      %749 = vmatpush1.msra.mxu0 0.0
      %750 = vmatprep.subr.mxu0 0.0
      %751 = vmatpush1.msra.mxu0 0.0
      %752 = vmatprep.subr.mxu0 0.0
      %753 = vmatpush1.msra.mxu0 0.0
      %754 = vmatprep.subr.mxu0 0.0
      %755 = vmatpush1.msra.mxu0 0.0
      %756 = vmatprep.subr.mxu0 0.0
      %757 = vmatpush1.msra.mxu0 0.0
      %758 = vmatprep.subr.mxu0 0.0
      %759 = vmatpush1.msra.mxu0 0.0
      %760 = vmatprep.subr.mxu0 0.0
      %761 = vmatpush1.msra.mxu0 0.0
      %762 = vmatprep.subr.mxu0 0.0
      %763 = vmatpush1.msra.mxu0 0.0
      %764 = vmatprep.subr.mxu0 0.0
      %765 = vmatpush1.msra.mxu0 0.0
      %766 = vmatprep.subr.mxu0 0.0
      %767 = vmatpush1.msra.mxu0 0.0
      %768 = vmatprep.subr.mxu0 0.0
      %769 = vmatpush1.msra.mxu0 0.0
      %770 = vmatprep.subr.mxu0 0.0
      %771 = vmatpush1.msra.mxu0 0.0
      %772 = vmatprep.subr.mxu0 0.0
      %773 = vmatpush1.msra.mxu0 0.0
      %774 = vmatprep.subr.mxu0 0.0
      %775 = vmatpush1.msra.mxu0 0.0
      %776 = vmatprep.subr.mxu0 0.0
      %777 = vmatpush1.msra.mxu0 0.0
      %778 = vmatprep.subr.mxu0 0.0
      %779 = vmatpush1.msra.mxu0 0.0
      %780 = vmatprep.subr.mxu0 0.0
      %781 = vmatpush1.msra.mxu0 0.0
      %782 = vmatprep.subr.mxu0 0.0
      %783 = vmatpush1.msra.mxu0 0.0
      %784 = vmatprep.subr.mxu0 0.0
      %785 = vmatpush1.msra.mxu0 0.0
      %786 = vmatprep.subr.mxu0 0.0
      %787 = vmatpush1.msra.mxu0 0.0
      %788 = vmatprep.subr.mxu0 0.0
      %789 = vmatpush1.msra.mxu0 0.0
      %790 = vmatprep.subr.mxu0 0.0
      %791 = vmatpush1.msra.mxu0 0.0
      %792 = vmatprep.subr.mxu0 0.0
      %793 = vmatpush1.msra.mxu0 0.0
      %794 = vmatprep.subr.mxu0 0.0
      %795 = vmatpush1.msra.mxu0 0.0
      %796 = vmatprep.subr.mxu0 0.0
      %797 = vmatpush1.msra.mxu0 0.0
      %798 = vmatprep.subr.mxu0 0.0
      %799 = vmatpush1.msra.mxu0 0.0
      %800 = vmatprep.subr.mxu0 0.0
      %801 = vmatpush1.msra.mxu0 0.0
      %802 = vmatprep.subr.mxu0 0.0
      %803 = vmatpush1.msra.mxu0 0.0
      %804 = vmatprep.subr.mxu0 0.0
      %805 = vmatpush1.msra.mxu0 0.0
      %806 = vmatprep.mubr.f32.mxu0 0.0
      %807 = vmatmul.mubr.f32.gmra.mrb[0].mxu0 %v740
      %v808 = vpop.f32.mrb[0].mxu0
      %v809 = vadd.f32 0.0, %v808
      %v810 = vpop.f32.mrb[0].mxu0
      %811 = vdwg.mxu0
      %v812 = vsel %vm200, %v171, 0
      %814 = vmatprep.subr.mxu0 0.0
      %815 = vmatpush1.msra.mxu0 %v189
      %816 = vmatprep.subr.mxu0 0.0
      %817 = vmatpush1.msra.mxu0 %v190
      %818 = vmatprep.subr.mxu0 0.0
      %819 = vmatpush1.msra.mxu0 0.0
      %820 = vmatprep.subr.mxu0 0.0
      %821 = vmatpush1.msra.mxu0 0.0
      %822 = vmatprep.subr.mxu0 0.0
      %823 = vmatpush1.msra.mxu0 0.0
      %824 = vmatprep.subr.mxu0 0.0
      %825 = vmatpush1.msra.mxu0 0.0
      %826 = vmatprep.subr.mxu0 0.0
      %827 = vmatpush1.msra.mxu0 0.0
      %828 = vmatprep.subr.mxu0 0.0
      %829 = vmatpush1.msra.mxu0 0.0
      %830 = vmatprep.subr.mxu0 0.0
      %831 = vmatpush1.msra.mxu0 0.0
      %832 = vmatprep.subr.mxu0 0.0
      %833 = vmatpush1.msra.mxu0 0.0
      %834 = vmatprep.subr.mxu0 0.0
      %835 = vmatpush1.msra.mxu0 0.0
      %836 = vmatprep.subr.mxu0 0.0
      %837 = vmatpush1.msra.mxu0 0.0
      %838 = vmatprep.subr.mxu0 0.0
      %839 = vmatpush1.msra.mxu0 0.0
      %840 = vmatprep.subr.mxu0 0.0
      %841 = vmatpush1.msra.mxu0 0.0
      %842 = vmatprep.subr.mxu0 0.0
      %843 = vmatpush1.msra.mxu0 0.0
      %844 = vmatprep.subr.mxu0 0.0
      %845 = vmatpush1.msra.mxu0 0.0
      %846 = vmatprep.subr.mxu0 0.0
      %847 = vmatpush1.msra.mxu0 0.0
      %848 = vmatprep.subr.mxu0 0.0
      %849 = vmatpush1.msra.mxu0 0.0
      %850 = vmatprep.subr.mxu0 0.0
      %851 = vmatpush1.msra.mxu0 0.0
      %852 = vmatprep.subr.mxu0 0.0
      %853 = vmatpush1.msra.mxu0 0.0
      %854 = vmatprep.subr.mxu0 0.0
      %855 = vmatpush1.msra.mxu0 0.0
      %856 = vmatprep.subr.mxu0 0.0
      %857 = vmatpush1.msra.mxu0 0.0
      %858 = vmatprep.subr.mxu0 0.0
      %859 = vmatpush1.msra.mxu0 0.0
      %860 = vmatprep.subr.mxu0 0.0
      %861 = vmatpush1.msra.mxu0 0.0
      %862 = vmatprep.subr.mxu0 0.0
      %863 = vmatpush1.msra.mxu0 0.0
      %864 = vmatprep.subr.mxu0 0.0
      %865 = vmatpush1.msra.mxu0 0.0
      %866 = vmatprep.subr.mxu0 0.0
      %867 = vmatpush1.msra.mxu0 0.0
      %868 = vmatprep.subr.mxu0 0.0
      %869 = vmatpush1.msra.mxu0 0.0
      %870 = vmatprep.subr.mxu0 0.0
      %871 = vmatpush1.msra.mxu0 0.0
      %872 = vmatprep.subr.mxu0 0.0
      %873 = vmatpush1.msra.mxu0 0.0
      %874 = vmatprep.subr.mxu0 0.0
      %875 = vmatpush1.msra.mxu0 0.0
      %876 = vmatprep.subr.mxu0 0.0
      %877 = vmatpush1.msra.mxu0 0.0
      %878 = vmatprep.mubr.f32.mxu0 0.0
      %879 = vmatmul.mubr.f32.gmra.mrb[0].mxu0 %v812
      %v880 = vpop.f32.mrb[0].mxu0
      %v881 = vadd.f32 %v270, %v880
      %v882 = vpop.f32.mrb[0].mxu0
      %883 = vdwg.mxu0
      %v884 = vsel %vm200, %v173, 0
      %886 = vmatprep.subr.mxu0 0.0
      %887 = vmatpush1.msra.mxu0 %v189
      %888 = vmatprep.subr.mxu0 0.0
      %889 = vmatpush1.msra.mxu0 %v190
      %890 = vmatprep.subr.mxu0 0.0
      %891 = vmatpush1.msra.mxu0 0.0
      %892 = vmatprep.subr.mxu0 0.0
      %893 = vmatpush1.msra.mxu0 0.0
      %894 = vmatprep.subr.mxu0 0.0
      %895 = vmatpush1.msra.mxu0 0.0
      %896 = vmatprep.subr.mxu0 0.0
      %897 = vmatpush1.msra.mxu0 0.0
      %898 = vmatprep.subr.mxu0 0.0
      %899 = vmatpush1.msra.mxu0 0.0
      %900 = vmatprep.subr.mxu0 0.0
      %901 = vmatpush1.msra.mxu0 0.0
      %902 = vmatprep.subr.mxu0 0.0
      %903 = vmatpush1.msra.mxu0 0.0
      %904 = vmatprep.subr.mxu0 0.0
      %905 = vmatpush1.msra.mxu0 0.0
      %906 = vmatprep.subr.mxu0 0.0
      %907 = vmatpush1.msra.mxu0 0.0
      %908 = vmatprep.subr.mxu0 0.0
      %909 = vmatpush1.msra.mxu0 0.0
      %910 = vmatprep.subr.mxu0 0.0
      %911 = vmatpush1.msra.mxu0 0.0
      %912 = vmatprep.subr.mxu0 0.0
      %913 = vmatpush1.msra.mxu0 0.0
      %914 = vmatprep.subr.mxu0 0.0
      %915 = vmatpush1.msra.mxu0 0.0
      %916 = vmatprep.subr.mxu0 0.0
      %917 = vmatpush1.msra.mxu0 0.0
      %918 = vmatprep.subr.mxu0 0.0
      %919 = vmatpush1.msra.mxu0 0.0
      %920 = vmatprep.subr.mxu0 0.0
      %921 = vmatpush1.msra.mxu0 0.0
      %922 = vmatprep.subr.mxu0 0.0
      %923 = vmatpush1.msra.mxu0 0.0
      %924 = vmatprep.subr.mxu0 0.0
      %925 = vmatpush1.msra.mxu0 0.0
      %926 = vmatprep.subr.mxu0 0.0
      %927 = vmatpush1.msra.mxu0 0.0
      %928 = vmatprep.subr.mxu0 0.0
      %929 = vmatpush1.msra.mxu0 0.0
      %930 = vmatprep.subr.mxu0 0.0
      %931 = vmatpush1.msra.mxu0 0.0
      %932 = vmatprep.subr.mxu0 0.0
      %933 = vmatpush1.msra.mxu0 0.0
      %934 = vmatprep.subr.mxu0 0.0
      %935 = vmatpush1.msra.mxu0 0.0
      %936 = vmatprep.subr.mxu0 0.0
      %937 = vmatpush1.msra.mxu0 0.0
      %938 = vmatprep.subr.mxu0 0.0
      %939 = vmatpush1.msra.mxu0 0.0
      %940 = vmatprep.subr.mxu0 0.0
      %941 = vmatpush1.msra.mxu0 0.0
      %942 = vmatprep.subr.mxu0 0.0
      %943 = vmatpush1.msra.mxu0 0.0
      %944 = vmatprep.subr.mxu0 0.0
      %945 = vmatpush1.msra.mxu0 0.0
      %946 = vmatprep.subr.mxu0 0.0
      %947 = vmatpush1.msra.mxu0 0.0
      %948 = vmatprep.subr.mxu0 0.0
      %949 = vmatpush1.msra.mxu0 0.0
      %950 = vmatprep.mubr.f32.mxu0 0.0
      %951 = vmatmul.mubr.f32.gmra.mrb[0].mxu0 %v884
      %v952 = vpop.f32.mrb[0].mxu0
      %v953 = vadd.f32 %v347, %v952
      %v954 = vpop.f32.mrb[0].mxu0
      %955 = vdwg.mxu0
      %v956 = vsel %vm200, %v175, 0
      %958 = vmatprep.subr.mxu0 0.0
      %959 = vmatpush1.msra.mxu0 %v189
      %960 = vmatprep.subr.mxu0 0.0
      %961 = vmatpush1.msra.mxu0 %v190
      %962 = vmatprep.subr.mxu0 0.0
      %963 = vmatpush1.msra.mxu0 0.0
      %964 = vmatprep.subr.mxu0 0.0
      %965 = vmatpush1.msra.mxu0 0.0
      %966 = vmatprep.subr.mxu0 0.0
      %967 = vmatpush1.msra.mxu0 0.0
      %968 = vmatprep.subr.mxu0 0.0
      %969 = vmatpush1.msra.mxu0 0.0
      %970 = vmatprep.subr.mxu0 0.0
      %971 = vmatpush1.msra.mxu0 0.0
      %972 = vmatprep.subr.mxu0 0.0
      %973 = vmatpush1.msra.mxu0 0.0
      %974 = vmatprep.subr.mxu0 0.0
      %975 = vmatpush1.msra.mxu0 0.0
      %976 = vmatprep.subr.mxu0 0.0
      %977 = vmatpush1.msra.mxu0 0.0
      %978 = vmatprep.subr.mxu0 0.0
      %979 = vmatpush1.msra.mxu0 0.0
      %980 = vmatprep.subr.mxu0 0.0
      %981 = vmatpush1.msra.mxu0 0.0
      %982 = vmatprep.subr.mxu0 0.0
      %983 = vmatpush1.msra.mxu0 0.0
      %984 = vmatprep.subr.mxu0 0.0
      %985 = vmatpush1.msra.mxu0 0.0
      %986 = vmatprep.subr.mxu0 0.0
      %987 = vmatpush1.msra.mxu0 0.0
      %988 = vmatprep.subr.mxu0 0.0
      %989 = vmatpush1.msra.mxu0 0.0
      %990 = vmatprep.subr.mxu0 0.0
      %991 = vmatpush1.msra.mxu0 0.0
      %992 = vmatprep.subr.mxu0 0.0
      %993 = vmatpush1.msra.mxu0 0.0
      %994 = vmatprep.subr.mxu0 0.0
      %995 = vmatpush1.msra.mxu0 0.0
      %996 = vmatprep.subr.mxu0 0.0
      %997 = vmatpush1.msra.mxu0 0.0
      %998 = vmatprep.subr.mxu0 0.0
      %999 = vmatpush1.msra.mxu0 0.0
      %1000 = vmatprep.subr.mxu0 0.0
      %1001 = vmatpush1.msra.mxu0 0.0
      %1002 = vmatprep.subr.mxu0 0.0
      %1003 = vmatpush1.msra.mxu0 0.0
      %1004 = vmatprep.subr.mxu0 0.0
      %1005 = vmatpush1.msra.mxu0 0.0
      %1006 = vmatprep.subr.mxu0 0.0
      %1007 = vmatpush1.msra.mxu0 0.0
      %1008 = vmatprep.subr.mxu0 0.0
      %1009 = vmatpush1.msra.mxu0 0.0
      %1010 = vmatprep.subr.mxu0 0.0
      %1011 = vmatpush1.msra.mxu0 0.0
      %1012 = vmatprep.subr.mxu0 0.0
      %1013 = vmatpush1.msra.mxu0 0.0
      %1014 = vmatprep.subr.mxu0 0.0
      %1015 = vmatpush1.msra.mxu0 0.0
      %1016 = vmatprep.subr.mxu0 0.0
      %1017 = vmatpush1.msra.mxu0 0.0
      %1018 = vmatprep.subr.mxu0 0.0
      %1019 = vmatpush1.msra.mxu0 0.0
      %1020 = vmatprep.subr.mxu0 0.0
      %1021 = vmatpush1.msra.mxu0 0.0
      %1022 = vmatprep.mubr.f32.mxu0 0.0
      %1023 = vmatmul.mubr.f32.gmra.mrb[0].mxu0 %v956
      %v1024 = vpop.f32.mrb[0].mxu0
      %v1025 = vadd.f32 %v424, %v1024
      %v1026 = vpop.f32.mrb[0].mxu0
      %1027 = vdwg.mxu0
      %v1028 = vsel %vm200, %v177, 0
      %1030 = vmatprep.subr.mxu0 0.0
      %1031 = vmatpush1.msra.mxu0 %v189
      %1032 = vmatprep.subr.mxu0 0.0
      %1033 = vmatpush1.msra.mxu0 %v190
      %1034 = vmatprep.subr.mxu0 0.0
      %1035 = vmatpush1.msra.mxu0 0.0
      %1036 = vmatprep.subr.mxu0 0.0
      %1037 = vmatpush1.msra.mxu0 0.0
      %1038 = vmatprep.subr.mxu0 0.0
      %1039 = vmatpush1.msra.mxu0 0.0
      %1040 = vmatprep.subr.mxu0 0.0
      %1041 = vmatpush1.msra.mxu0 0.0
      %1042 = vmatprep.subr.mxu0 0.0
      %1043 = vmatpush1.msra.mxu0 0.0
      %1044 = vmatprep.subr.mxu0 0.0
      %1045 = vmatpush1.msra.mxu0 0.0
      %1046 = vmatprep.subr.mxu0 0.0
      %1047 = vmatpush1.msra.mxu0 0.0
      %1048 = vmatprep.subr.mxu0 0.0
      %1049 = vmatpush1.msra.mxu0 0.0
      %1050 = vmatprep.subr.mxu0 0.0
      %1051 = vmatpush1.msra.mxu0 0.0
      %1052 = vmatprep.subr.mxu0 0.0
      %1053 = vmatpush1.msra.mxu0 0.0
      %1054 = vmatprep.subr.mxu0 0.0
      %1055 = vmatpush1.msra.mxu0 0.0
      %1056 = vmatprep.subr.mxu0 0.0
      %1057 = vmatpush1.msra.mxu0 0.0
      %1058 = vmatprep.subr.mxu0 0.0
      %1059 = vmatpush1.msra.mxu0 0.0
      %1060 = vmatprep.subr.mxu0 0.0
      %1061 = vmatpush1.msra.mxu0 0.0
      %1062 = vmatprep.subr.mxu0 0.0
      %1063 = vmatpush1.msra.mxu0 0.0
      %1064 = vmatprep.subr.mxu0 0.0
      %1065 = vmatpush1.msra.mxu0 0.0
      %1066 = vmatprep.subr.mxu0 0.0
      %1067 = vmatpush1.msra.mxu0 0.0
      %1068 = vmatprep.subr.mxu0 0.0
      %1069 = vmatpush1.msra.mxu0 0.0
      %1070 = vmatprep.subr.mxu0 0.0
      %1071 = vmatpush1.msra.mxu0 0.0
      %1072 = vmatprep.subr.mxu0 0.0
      %1073 = vmatpush1.msra.mxu0 0.0
      %1074 = vmatprep.subr.mxu0 0.0
      %1075 = vmatpush1.msra.mxu0 0.0
      %1076 = vmatprep.subr.mxu0 0.0
      %1077 = vmatpush1.msra.mxu0 0.0
      %1078 = vmatprep.subr.mxu0 0.0
      %1079 = vmatpush1.msra.mxu0 0.0
      %1080 = vmatprep.subr.mxu0 0.0
      %1081 = vmatpush1.msra.mxu0 0.0
      %1082 = vmatprep.subr.mxu0 0.0
      %1083 = vmatpush1.msra.mxu0 0.0
      %1084 = vmatprep.subr.mxu0 0.0
      %1085 = vmatpush1.msra.mxu0 0.0
      %1086 = vmatprep.subr.mxu0 0.0
      %1087 = vmatpush1.msra.mxu0 0.0
      %1088 = vmatprep.subr.mxu0 0.0
      %1089 = vmatpush1.msra.mxu0 0.0
      %1090 = vmatprep.subr.mxu0 0.0
      %1091 = vmatpush1.msra.mxu0 0.0
      %1092 = vmatprep.subr.mxu0 0.0
      %1093 = vmatpush1.msra.mxu0 0.0
      %1094 = vmatprep.mubr.f32.mxu0 0.0
      %1095 = vmatmul.mubr.f32.gmra.mrb[0].mxu0 %v1028
      %v1096 = vpop.f32.mrb[0].mxu0
      %v1097 = vadd.f32 %v501, %v1096
      %v1098 = vpop.f32.mrb[0].mxu0
      %1099 = vdwg.mxu0
      %v1100 = vsel %vm200, %v179, 0
      %1102 = vmatprep.subr.mxu0 0.0
      %1103 = vmatpush1.msra.mxu0 %v189
      %1104 = vmatprep.subr.mxu0 0.0
      %1105 = vmatpush1.msra.mxu0 %v190
      %1106 = vmatprep.subr.mxu0 0.0
      %1107 = vmatpush1.msra.mxu0 0.0
      %1108 = vmatprep.subr.mxu0 0.0
      %1109 = vmatpush1.msra.mxu0 0.0
      %1110 = vmatprep.subr.mxu0 0.0
      %1111 = vmatpush1.msra.mxu0 0.0
      %1112 = vmatprep.subr.mxu0 0.0
      %1113 = vmatpush1.msra.mxu0 0.0
      %1114 = vmatprep.subr.mxu0 0.0
      %1115 = vmatpush1.msra.mxu0 0.0
      %1116 = vmatprep.subr.mxu0 0.0
      %1117 = vmatpush1.msra.mxu0 0.0
      %1118 = vmatprep.subr.mxu0 0.0
      %1119 = vmatpush1.msra.mxu0 0.0
      %1120 = vmatprep.subr.mxu0 0.0
      %1121 = vmatpush1.msra.mxu0 0.0
      %1122 = vmatprep.subr.mxu0 0.0
      %1123 = vmatpush1.msra.mxu0 0.0
      %1124 = vmatprep.subr.mxu0 0.0
      %1125 = vmatpush1.msra.mxu0 0.0
      %1126 = vmatprep.subr.mxu0 0.0
      %1127 = vmatpush1.msra.mxu0 0.0
      %1128 = vmatprep.subr.mxu0 0.0
      %1129 = vmatpush1.msra.mxu0 0.0
      %1130 = vmatprep.subr.mxu0 0.0
      %1131 = vmatpush1.msra.mxu0 0.0
      %1132 = vmatprep.subr.mxu0 0.0
      %1133 = vmatpush1.msra.mxu0 0.0
      %1134 = vmatprep.subr.mxu0 0.0
      %1135 = vmatpush1.msra.mxu0 0.0
      %1136 = vmatprep.subr.mxu0 0.0
      %1137 = vmatpush1.msra.mxu0 0.0
      %1138 = vmatprep.subr.mxu0 0.0
      %1139 = vmatpush1.msra.mxu0 0.0
      %1140 = vmatprep.subr.mxu0 0.0
      %1141 = vmatpush1.msra.mxu0 0.0
      %1142 = vmatprep.subr.mxu0 0.0
      %1143 = vmatpush1.msra.mxu0 0.0
      %1144 = vmatprep.subr.mxu0 0.0
      %1145 = vmatpush1.msra.mxu0 0.0
      %1146 = vmatprep.subr.mxu0 0.0
      %1147 = vmatpush1.msra.mxu0 0.0
      %1148 = vmatprep.subr.mxu0 0.0
      %1149 = vmatpush1.msra.mxu0 0.0
      %1150 = vmatprep.subr.mxu0 0.0
      %1151 = vmatpush1.msra.mxu0 0.0
      %1152 = vmatprep.subr.mxu0 0.0
      %1153 = vmatpush1.msra.mxu0 0.0
      %1154 = vmatprep.subr.mxu0 0.0
      %1155 = vmatpush1.msra.mxu0 0.0
      %1156 = vmatprep.subr.mxu0 0.0
      %1157 = vmatpush1.msra.mxu0 0.0
      %1158 = vmatprep.subr.mxu0 0.0
      %1159 = vmatpush1.msra.mxu0 0.0
      %1160 = vmatprep.subr.mxu0 0.0
      %1161 = vmatpush1.msra.mxu0 0.0
      %1162 = vmatprep.subr.mxu0 0.0
      %1163 = vmatpush1.msra.mxu0 0.0
      %1164 = vmatprep.subr.mxu0 0.0
      %1165 = vmatpush1.msra.mxu0 0.0
      %1166 = vmatprep.mubr.f32.mxu0 0.0
      %1167 = vmatmul.mubr.f32.gmra.mrb[0].mxu0 %v1100
      %v1168 = vpop.f32.mrb[0].mxu0
      %v1169 = vadd.f32 %v578, %v1168
      %v1170 = vpop.f32.mrb[0].mxu0
      %1171 = vdwg.mxu0
      %v1172 = vsel %vm200, %v181, 0
      %1174 = vmatprep.subr.mxu0 0.0
      %1175 = vmatpush1.msra.mxu0 %v189
      %1176 = vmatprep.subr.mxu0 0.0
      %1177 = vmatpush1.msra.mxu0 %v190
      %1178 = vmatprep.subr.mxu0 0.0
      %1179 = vmatpush1.msra.mxu0 0.0
      %1180 = vmatprep.subr.mxu0 0.0
      %1181 = vmatpush1.msra.mxu0 0.0
      %1182 = vmatprep.subr.mxu0 0.0
      %1183 = vmatpush1.msra.mxu0 0.0
      %1184 = vmatprep.subr.mxu0 0.0
      %1185 = vmatpush1.msra.mxu0 0.0
      %1186 = vmatprep.subr.mxu0 0.0
      %1187 = vmatpush1.msra.mxu0 0.0
      %1188 = vmatprep.subr.mxu0 0.0
      %1189 = vmatpush1.msra.mxu0 0.0
      %1190 = vmatprep.subr.mxu0 0.0
      %1191 = vmatpush1.msra.mxu0 0.0
      %1192 = vmatprep.subr.mxu0 0.0
      %1193 = vmatpush1.msra.mxu0 0.0
      %1194 = vmatprep.subr.mxu0 0.0
      %1195 = vmatpush1.msra.mxu0 0.0
      %1196 = vmatprep.subr.mxu0 0.0
      %1197 = vmatpush1.msra.mxu0 0.0
      %1198 = vmatprep.subr.mxu0 0.0
      %1199 = vmatpush1.msra.mxu0 0.0
      %1200 = vmatprep.subr.mxu0 0.0
      %1201 = vmatpush1.msra.mxu0 0.0
      %1202 = vmatprep.subr.mxu0 0.0
      %1203 = vmatpush1.msra.mxu0 0.0
      %1204 = vmatprep.subr.mxu0 0.0
      %1205 = vmatpush1.msra.mxu0 0.0
      %1206 = vmatprep.subr.mxu0 0.0
      %1207 = vmatpush1.msra.mxu0 0.0
      %1208 = vmatprep.subr.mxu0 0.0
      %1209 = vmatpush1.msra.mxu0 0.0
      %1210 = vmatprep.subr.mxu0 0.0
      %1211 = vmatpush1.msra.mxu0 0.0
      %1212 = vmatprep.subr.mxu0 0.0
      %1213 = vmatpush1.msra.mxu0 0.0
      %1214 = vmatprep.subr.mxu0 0.0
      %1215 = vmatpush1.msra.mxu0 0.0
      %1216 = vmatprep.subr.mxu0 0.0
      %1217 = vmatpush1.msra.mxu0 0.0
      %1218 = vmatprep.subr.mxu0 0.0
      %1219 = vmatpush1.msra.mxu0 0.0
      %1220 = vmatprep.subr.mxu0 0.0
      %1221 = vmatpush1.msra.mxu0 0.0
      %1222 = vmatprep.subr.mxu0 0.0
      %1223 = vmatpush1.msra.mxu0 0.0
      %1224 = vmatprep.subr.mxu0 0.0
      %1225 = vmatpush1.msra.mxu0 0.0
      %1226 = vmatprep.subr.mxu0 0.0
      %1227 = vmatpush1.msra.mxu0 0.0
      %1228 = vmatprep.subr.mxu0 0.0
      %1229 = vmatpush1.msra.mxu0 0.0
      %1230 = vmatprep.subr.mxu0 0.0
      %1231 = vmatpush1.msra.mxu0 0.0
      %1232 = vmatprep.subr.mxu0 0.0
      %1233 = vmatpush1.msra.mxu0 0.0
      %1234 = vmatprep.subr.mxu0 0.0
      %1235 = vmatpush1.msra.mxu0 0.0
      %1236 = vmatprep.subr.mxu0 0.0
      %1237 = vmatpush1.msra.mxu0 0.0
      %1238 = vmatprep.mubr.f32.mxu0 0.0
      %1239 = vmatmul.mubr.f32.gmra.mrb[0].mxu0 %v1172
      %v1240 = vpop.f32.mrb[0].mxu0
      %v1241 = vadd.f32 %v655, %v1240
      %v1242 = vpop.f32.mrb[0].mxu0
      %1243 = vdwg.mxu0
      %v1244 = vsel %vm200, %v183, 0
      %1246 = vmatprep.subr.mxu0 0.0
      %1247 = vmatpush1.msra.mxu0 %v189
      %1248 = vmatprep.subr.mxu0 0.0
      %1249 = vmatpush1.msra.mxu0 %v190
      %1250 = vmatprep.subr.mxu0 0.0
      %1251 = vmatpush1.msra.mxu0 0.0
      %1252 = vmatprep.subr.mxu0 0.0
      %1253 = vmatpush1.msra.mxu0 0.0
      %1254 = vmatprep.subr.mxu0 0.0
      %1255 = vmatpush1.msra.mxu0 0.0
      %1256 = vmatprep.subr.mxu0 0.0
      %1257 = vmatpush1.msra.mxu0 0.0
      %1258 = vmatprep.subr.mxu0 0.0
      %1259 = vmatpush1.msra.mxu0 0.0
      %1260 = vmatprep.subr.mxu0 0.0
      %1261 = vmatpush1.msra.mxu0 0.0
      %1262 = vmatprep.subr.mxu0 0.0
      %1263 = vmatpush1.msra.mxu0 0.0
      %1264 = vmatprep.subr.mxu0 0.0
      %1265 = vmatpush1.msra.mxu0 0.0
      %1266 = vmatprep.subr.mxu0 0.0
      %1267 = vmatpush1.msra.mxu0 0.0
      %1268 = vmatprep.subr.mxu0 0.0
      %1269 = vmatpush1.msra.mxu0 0.0
      %1270 = vmatprep.subr.mxu0 0.0
      %1271 = vmatpush1.msra.mxu0 0.0
      %1272 = vmatprep.subr.mxu0 0.0
      %1273 = vmatpush1.msra.mxu0 0.0
      %1274 = vmatprep.subr.mxu0 0.0
      %1275 = vmatpush1.msra.mxu0 0.0
      %1276 = vmatprep.subr.mxu0 0.0
      %1277 = vmatpush1.msra.mxu0 0.0
      %1278 = vmatprep.subr.mxu0 0.0
      %1279 = vmatpush1.msra.mxu0 0.0
      %1280 = vmatprep.subr.mxu0 0.0
      %1281 = vmatpush1.msra.mxu0 0.0
      %1282 = vmatprep.subr.mxu0 0.0
      %1283 = vmatpush1.msra.mxu0 0.0
      %1284 = vmatprep.subr.mxu0 0.0
      %1285 = vmatpush1.msra.mxu0 0.0
      %1286 = vmatprep.subr.mxu0 0.0
      %1287 = vmatpush1.msra.mxu0 0.0
      %1288 = vmatprep.subr.mxu0 0.0
      %1289 = vmatpush1.msra.mxu0 0.0
      %1290 = vmatprep.subr.mxu0 0.0
      %1291 = vmatpush1.msra.mxu0 0.0
      %1292 = vmatprep.subr.mxu0 0.0
      %1293 = vmatpush1.msra.mxu0 0.0
      %1294 = vmatprep.subr.mxu0 0.0
      %1295 = vmatpush1.msra.mxu0 0.0
      %1296 = vmatprep.subr.mxu0 0.0
      %1297 = vmatpush1.msra.mxu0 0.0
      %1298 = vmatprep.subr.mxu0 0.0
      %1299 = vmatpush1.msra.mxu0 0.0
      %1300 = vmatprep.subr.mxu0 0.0
      %1301 = vmatpush1.msra.mxu0 0.0
      %1302 = vmatprep.subr.mxu0 0.0
      %1303 = vmatpush1.msra.mxu0 0.0
      %1304 = vmatprep.subr.mxu0 0.0
      %1305 = vmatpush1.msra.mxu0 0.0
      %1306 = vmatprep.subr.mxu0 0.0
      %1307 = vmatpush1.msra.mxu0 0.0
      %1308 = vmatprep.subr.mxu0 0.0
      %1309 = vmatpush1.msra.mxu0 0.0
      %1310 = vmatprep.mubr.f32.mxu0 0.0
      %1311 = vmatmul.mubr.f32.gmra.mrb[0].mxu0 %v1244
      %v1312 = vpop.f32.mrb[0].mxu0
      %v1313 = vadd.f32 %v732, %v1312
      %v1314 = vpop.f32.mrb[0].mxu0
      %1315 = vdwg.mxu0
      %v1316 = vsel %vm200, %v185, 0
      %1318 = vmatprep.subr.mxu0 0.0
      %1319 = vmatpush1.msra.mxu0 %v189
      %1320 = vmatprep.subr.mxu0 0.0
      %1321 = vmatpush1.msra.mxu0 %v190
      %1322 = vmatprep.subr.mxu0 0.0
      %1323 = vmatpush1.msra.mxu0 0.0
      %1324 = vmatprep.subr.mxu0 0.0
      %1325 = vmatpush1.msra.mxu0 0.0
      %1326 = vmatprep.subr.mxu0 0.0
      %1327 = vmatpush1.msra.mxu0 0.0
      %1328 = vmatprep.subr.mxu0 0.0
      %1329 = vmatpush1.msra.mxu0 0.0
      %1330 = vmatprep.subr.mxu0 0.0
      %1331 = vmatpush1.msra.mxu0 0.0
      %1332 = vmatprep.subr.mxu0 0.0
      %1333 = vmatpush1.msra.mxu0 0.0
      %1334 = vmatprep.subr.mxu0 0.0
      %1335 = vmatpush1.msra.mxu0 0.0
      %1336 = vmatprep.subr.mxu0 0.0
      %1337 = vmatpush1.msra.mxu0 0.0
      %1338 = vmatprep.subr.mxu0 0.0
      %1339 = vmatpush1.msra.mxu0 0.0
      %1340 = vmatprep.subr.mxu0 0.0
      %1341 = vmatpush1.msra.mxu0 0.0
      %1342 = vmatprep.subr.mxu0 0.0
      %1343 = vmatpush1.msra.mxu0 0.0
      %1344 = vmatprep.subr.mxu0 0.0
      %1345 = vmatpush1.msra.mxu0 0.0
      %1346 = vmatprep.subr.mxu0 0.0
      %1347 = vmatpush1.msra.mxu0 0.0
      %1348 = vmatprep.subr.mxu0 0.0
      %1349 = vmatpush1.msra.mxu0 0.0
      %1350 = vmatprep.subr.mxu0 0.0
      %1351 = vmatpush1.msra.mxu0 0.0
      %1352 = vmatprep.subr.mxu0 0.0
      %1353 = vmatpush1.msra.mxu0 0.0
      %1354 = vmatprep.subr.mxu0 0.0
      %1355 = vmatpush1.msra.mxu0 0.0
      %1356 = vmatprep.subr.mxu0 0.0
      %1357 = vmatpush1.msra.mxu0 0.0
      %1358 = vmatprep.subr.mxu0 0.0
      %1359 = vmatpush1.msra.mxu0 0.0
      %1360 = vmatprep.subr.mxu0 0.0
      %1361 = vmatpush1.msra.mxu0 0.0
      %1362 = vmatprep.subr.mxu0 0.0
      %1363 = vmatpush1.msra.mxu0 0.0
      %1364 = vmatprep.subr.mxu0 0.0
      %1365 = vmatpush1.msra.mxu0 0.0
      %1366 = vmatprep.subr.mxu0 0.0
      %1367 = vmatpush1.msra.mxu0 0.0
      %1368 = vmatprep.subr.mxu0 0.0
      %1369 = vmatpush1.msra.mxu0 0.0
      %1370 = vmatprep.subr.mxu0 0.0
      %1371 = vmatpush1.msra.mxu0 0.0
      %1372 = vmatprep.subr.mxu0 0.0
      %1373 = vmatpush1.msra.mxu0 0.0
      %1374 = vmatprep.subr.mxu0 0.0
      %1375 = vmatpush1.msra.mxu0 0.0
      %1376 = vmatprep.subr.mxu0 0.0
      %1377 = vmatpush1.msra.mxu0 0.0
      %1378 = vmatprep.subr.mxu0 0.0
      %1379 = vmatpush1.msra.mxu0 0.0
      %1380 = vmatprep.subr.mxu0 0.0
      %1381 = vmatpush1.msra.mxu0 0.0
      %1382 = vmatprep.mubr.f32.mxu0 0.0
      %1383 = vmatmul.mubr.f32.gmra.mrb[0].mxu0 %v1316
      %v1384 = vpop.f32.mrb[0].mxu0
      %v1385 = vadd.f32 %v809, %v1384
      %v1386 = vpop.f32.mrb[0].mxu0
      %1387 = vdwg.mxu0
      %s1388 = scalar_lea.vmem %s1, 32
      %v1389 = vld [vmem:[%s1388] sm:$0xff]
      %v1390 = vld [vmem:[%s1388 + $0x8] sm:$0xff]
      %1391 = vmatprep.subr.mxu0 0.0
      %1392 = vmatpush1.msra.mxu0 %v1389
      %1393 = vmatprep.subr.mxu0 0.0
      %1394 = vmatpush1.msra.mxu0 %v1390
      %1395 = vmatprep.subr.mxu0 0.0
      %1396 = vmatpush1.msra.mxu0 0.0
      %1397 = vmatprep.subr.mxu0 0.0
      %1398 = vmatpush1.msra.mxu0 0.0
      %1399 = vmatprep.subr.mxu0 0.0
      %1400 = vmatpush1.msra.mxu0 0.0
      %1401 = vmatprep.subr.mxu0 0.0
      %1402 = vmatpush1.msra.mxu0 0.0
      %1403 = vmatprep.subr.mxu0 0.0
      %1404 = vmatpush1.msra.mxu0 0.0
      %1405 = vmatprep.subr.mxu0 0.0
      %1406 = vmatpush1.msra.mxu0 0.0
      %1407 = vmatprep.subr.mxu0 0.0
      %1408 = vmatpush1.msra.mxu0 0.0
      %1409 = vmatprep.subr.mxu0 0.0
      %1410 = vmatpush1.msra.mxu0 0.0
      %1411 = vmatprep.subr.mxu0 0.0
      %1412 = vmatpush1.msra.mxu0 0.0
      %1413 = vmatprep.subr.mxu0 0.0
      %1414 = vmatpush1.msra.mxu0 0.0
      %1415 = vmatprep.subr.mxu0 0.0
      %1416 = vmatpush1.msra.mxu0 0.0
      %1417 = vmatprep.subr.mxu0 0.0
      %1418 = vmatpush1.msra.mxu0 0.0
      %1419 = vmatprep.subr.mxu0 0.0
      %1420 = vmatpush1.msra.mxu0 0.0
      %1421 = vmatprep.subr.mxu0 0.0
      %1422 = vmatpush1.msra.mxu0 0.0
      %1423 = vmatprep.subr.mxu0 0.0
      %1424 = vmatpush1.msra.mxu0 0.0
      %1425 = vmatprep.subr.mxu0 0.0
      %1426 = vmatpush1.msra.mxu0 0.0
      %1427 = vmatprep.subr.mxu0 0.0
      %1428 = vmatpush1.msra.mxu0 0.0
      %1429 = vmatprep.subr.mxu0 0.0
      %1430 = vmatpush1.msra.mxu0 0.0
      %1431 = vmatprep.subr.mxu0 0.0
      %1432 = vmatpush1.msra.mxu0 0.0
      %1433 = vmatprep.subr.mxu0 0.0
      %1434 = vmatpush1.msra.mxu0 0.0
      %1435 = vmatprep.subr.mxu0 0.0
      %1436 = vmatpush1.msra.mxu0 0.0
      %1437 = vmatprep.subr.mxu0 0.0
      %1438 = vmatpush1.msra.mxu0 0.0
      %1439 = vmatprep.subr.mxu0 0.0
      %1440 = vmatpush1.msra.mxu0 0.0
      %1441 = vmatprep.subr.mxu0 0.0
      %1442 = vmatpush1.msra.mxu0 0.0
      %1443 = vmatprep.subr.mxu0 0.0
      %1444 = vmatpush1.msra.mxu0 0.0
      %1445 = vmatprep.subr.mxu0 0.0
      %1446 = vmatpush1.msra.mxu0 0.0
      %1447 = vmatprep.subr.mxu0 0.0
      %1448 = vmatpush1.msra.mxu0 0.0
      %1449 = vmatprep.subr.mxu0 0.0
      %1450 = vmatpush1.msra.mxu0 0.0
      %1451 = vmatprep.subr.mxu0 0.0
      %1452 = vmatpush1.msra.mxu0 0.0
      %1453 = vmatprep.subr.mxu0 0.0
      %1454 = vmatpush1.msra.mxu0 0.0
      %1455 = vmatprep.mubr.f32.mxu0 0.0
      %1456 = vmatmul.mubr.f32.gmra.mrb[0].mxu0 %v884
      %v1457 = vpop.f32.mrb[0].mxu0
      %v1458 = vadd.f32 0.0, %v1457
      %v1459 = vpop.f32.mrb[0].mxu0
      %1460 = vdwg.mxu0
      %1461 = vmatprep.subr.mxu0 0.0
      %1462 = vmatpush1.msra.mxu0 %v1389
      %1463 = vmatprep.subr.mxu0 0.0
      %1464 = vmatpush1.msra.mxu0 %v1390
      %1465 = vmatprep.subr.mxu0 0.0
      %1466 = vmatpush1.msra.mxu0 0.0
      %1467 = vmatprep.subr.mxu0 0.0
      %1468 = vmatpush1.msra.mxu0 0.0
      %1469 = vmatprep.subr.mxu0 0.0
      %1470 = vmatpush1.msra.mxu0 0.0
      %1471 = vmatprep.subr.mxu0 0.0
      %1472 = vmatpush1.msra.mxu0 0.0
      %1473 = vmatprep.subr.mxu0 0.0
      %1474 = vmatpush1.msra.mxu0 0.0
      %1475 = vmatprep.subr.mxu0 0.0
      %1476 = vmatpush1.msra.mxu0 0.0
      %1477 = vmatprep.subr.mxu0 0.0
      %1478 = vmatpush1.msra.mxu0 0.0
      %1479 = vmatprep.subr.mxu0 0.0
      %1480 = vmatpush1.msra.mxu0 0.0
      %1481 = vmatprep.subr.mxu0 0.0
      %1482 = vmatpush1.msra.mxu0 0.0
      %1483 = vmatprep.subr.mxu0 0.0
      %1484 = vmatpush1.msra.mxu0 0.0
      %1485 = vmatprep.subr.mxu0 0.0
      %1486 = vmatpush1.msra.mxu0 0.0
      %1487 = vmatprep.subr.mxu0 0.0
      %1488 = vmatpush1.msra.mxu0 0.0
      %1489 = vmatprep.subr.mxu0 0.0
      %1490 = vmatpush1.msra.mxu0 0.0
      %1491 = vmatprep.subr.mxu0 0.0
      %1492 = vmatpush1.msra.mxu0 0.0
      %1493 = vmatprep.subr.mxu0 0.0
      %1494 = vmatpush1.msra.mxu0 0.0
      %1495 = vmatprep.subr.mxu0 0.0
      %1496 = vmatpush1.msra.mxu0 0.0
      %1497 = vmatprep.subr.mxu0 0.0
      %1498 = vmatpush1.msra.mxu0 0.0
      %1499 = vmatprep.subr.mxu0 0.0
      %1500 = vmatpush1.msra.mxu0 0.0
      %1501 = vmatprep.subr.mxu0 0.0
      %1502 = vmatpush1.msra.mxu0 0.0
      %1503 = vmatprep.subr.mxu0 0.0
      %1504 = vmatpush1.msra.mxu0 0.0
      %1505 = vmatprep.subr.mxu0 0.0
      %1506 = vmatpush1.msra.mxu0 0.0
      %1507 = vmatprep.subr.mxu0 0.0
      %1508 = vmatpush1.msra.mxu0 0.0
      %1509 = vmatprep.subr.mxu0 0.0
      %1510 = vmatpush1.msra.mxu0 0.0
      %1511 = vmatprep.subr.mxu0 0.0
      %1512 = vmatpush1.msra.mxu0 0.0
      %1513 = vmatprep.subr.mxu0 0.0
      %1514 = vmatpush1.msra.mxu0 0.0
      %1515 = vmatprep.subr.mxu0 0.0
      %1516 = vmatpush1.msra.mxu0 0.0
      %1517 = vmatprep.subr.mxu0 0.0
      %1518 = vmatpush1.msra.mxu0 0.0
      %1519 = vmatprep.subr.mxu0 0.0
      %1520 = vmatpush1.msra.mxu0 0.0
      %1521 = vmatprep.subr.mxu0 0.0
      %1522 = vmatpush1.msra.mxu0 0.0
      %1523 = vmatprep.subr.mxu0 0.0
      %1524 = vmatpush1.msra.mxu0 0.0
      %1525 = vmatprep.mubr.f32.mxu0 0.0
      %1526 = vmatmul.mubr.f32.gmra.mrb[0].mxu0 %v956
      %v1527 = vpop.f32.mrb[0].mxu0
      %v1528 = vadd.f32 0.0, %v1527
      %v1529 = vpop.f32.mrb[0].mxu0
      %1530 = vdwg.mxu0
      %1531 = vmatprep.subr.mxu0 0.0
      %1532 = vmatpush1.msra.mxu0 %v1389
      %1533 = vmatprep.subr.mxu0 0.0
      %1534 = vmatpush1.msra.mxu0 %v1390
      %1535 = vmatprep.subr.mxu0 0.0
      %1536 = vmatpush1.msra.mxu0 0.0
      %1537 = vmatprep.subr.mxu0 0.0
      %1538 = vmatpush1.msra.mxu0 0.0
      %1539 = vmatprep.subr.mxu0 0.0
      %1540 = vmatpush1.msra.mxu0 0.0
      %1541 = vmatprep.subr.mxu0 0.0
      %1542 = vmatpush1.msra.mxu0 0.0
      %1543 = vmatprep.subr.mxu0 0.0
      %1544 = vmatpush1.msra.mxu0 0.0
      %1545 = vmatprep.subr.mxu0 0.0
      %1546 = vmatpush1.msra.mxu0 0.0
      %1547 = vmatprep.subr.mxu0 0.0
      %1548 = vmatpush1.msra.mxu0 0.0
      %1549 = vmatprep.subr.mxu0 0.0
      %1550 = vmatpush1.msra.mxu0 0.0
      %1551 = vmatprep.subr.mxu0 0.0
      %1552 = vmatpush1.msra.mxu0 0.0
      %1553 = vmatprep.subr.mxu0 0.0
      %1554 = vmatpush1.msra.mxu0 0.0
      %1555 = vmatprep.subr.mxu0 0.0
      %1556 = vmatpush1.msra.mxu0 0.0
      %1557 = vmatprep.subr.mxu0 0.0
      %1558 = vmatpush1.msra.mxu0 0.0
      %1559 = vmatprep.subr.mxu0 0.0
      %1560 = vmatpush1.msra.mxu0 0.0
      %1561 = vmatprep.subr.mxu0 0.0
      %1562 = vmatpush1.msra.mxu0 0.0
      %1563 = vmatprep.subr.mxu0 0.0
      %1564 = vmatpush1.msra.mxu0 0.0
      %1565 = vmatprep.subr.mxu0 0.0
      %1566 = vmatpush1.msra.mxu0 0.0
      %1567 = vmatprep.subr.mxu0 0.0
      %1568 = vmatpush1.msra.mxu0 0.0
      %1569 = vmatprep.subr.mxu0 0.0
      %1570 = vmatpush1.msra.mxu0 0.0
      %1571 = vmatprep.subr.mxu0 0.0
      %1572 = vmatpush1.msra.mxu0 0.0
      %1573 = vmatprep.subr.mxu0 0.0
      %1574 = vmatpush1.msra.mxu0 0.0
      %1575 = vmatprep.subr.mxu0 0.0
      %1576 = vmatpush1.msra.mxu0 0.0
      %1577 = vmatprep.subr.mxu0 0.0
      %1578 = vmatpush1.msra.mxu0 0.0
      %1579 = vmatprep.subr.mxu0 0.0
      %1580 = vmatpush1.msra.mxu0 0.0
      %1581 = vmatprep.subr.mxu0 0.0
      %1582 = vmatpush1.msra.mxu0 0.0
      %1583 = vmatprep.subr.mxu0 0.0
      %1584 = vmatpush1.msra.mxu0 0.0
      %1585 = vmatprep.subr.mxu0 0.0
      %1586 = vmatpush1.msra.mxu0 0.0
      %1587 = vmatprep.subr.mxu0 0.0
      %1588 = vmatpush1.msra.mxu0 0.0
      %1589 = vmatprep.subr.mxu0 0.0
      %1590 = vmatpush1.msra.mxu0 0.0
      %1591 = vmatprep.subr.mxu0 0.0
      %1592 = vmatpush1.msra.mxu0 0.0
      %1593 = vmatprep.subr.mxu0 0.0
      %1594 = vmatpush1.msra.mxu0 0.0
      %1595 = vmatprep.mubr.f32.mxu0 0.0
      %1596 = vmatmul.mubr.f32.gmra.mrb[0].mxu0 %v1028
      %v1597 = vpop.f32.mrb[0].mxu0
      %v1598 = vadd.f32 0.0, %v1597
      %v1599 = vpop.f32.mrb[0].mxu0
      %1600 = vdwg.mxu0
      %1601 = vmatprep.subr.mxu0 0.0
      %1602 = vmatpush1.msra.mxu0 %v1389
      %1603 = vmatprep.subr.mxu0 0.0
      %1604 = vmatpush1.msra.mxu0 %v1390
      %1605 = vmatprep.subr.mxu0 0.0
      %1606 = vmatpush1.msra.mxu0 0.0
      %1607 = vmatprep.subr.mxu0 0.0
      %1608 = vmatpush1.msra.mxu0 0.0
      %1609 = vmatprep.subr.mxu0 0.0
      %1610 = vmatpush1.msra.mxu0 0.0
      %1611 = vmatprep.subr.mxu0 0.0
      %1612 = vmatpush1.msra.mxu0 0.0
      %1613 = vmatprep.subr.mxu0 0.0
      %1614 = vmatpush1.msra.mxu0 0.0
      %1615 = vmatprep.subr.mxu0 0.0
      %1616 = vmatpush1.msra.mxu0 0.0
      %1617 = vmatprep.subr.mxu0 0.0
      %1618 = vmatpush1.msra.mxu0 0.0
      %1619 = vmatprep.subr.mxu0 0.0
      %1620 = vmatpush1.msra.mxu0 0.0
      %1621 = vmatprep.subr.mxu0 0.0
      %1622 = vmatpush1.msra.mxu0 0.0
      %1623 = vmatprep.subr.mxu0 0.0
      %1624 = vmatpush1.msra.mxu0 0.0
      %1625 = vmatprep.subr.mxu0 0.0
      %1626 = vmatpush1.msra.mxu0 0.0
      %1627 = vmatprep.subr.mxu0 0.0
      %1628 = vmatpush1.msra.mxu0 0.0
      %1629 = vmatprep.subr.mxu0 0.0
      %1630 = vmatpush1.msra.mxu0 0.0
      %1631 = vmatprep.subr.mxu0 0.0
      %1632 = vmatpush1.msra.mxu0 0.0
      %1633 = vmatprep.subr.mxu0 0.0
      %1634 = vmatpush1.msra.mxu0 0.0
      %1635 = vmatprep.subr.mxu0 0.0
      %1636 = vmatpush1.msra.mxu0 0.0
      %1637 = vmatprep.subr.mxu0 0.0
      %1638 = vmatpush1.msra.mxu0 0.0
      %1639 = vmatprep.subr.mxu0 0.0
      %1640 = vmatpush1.msra.mxu0 0.0
      %1641 = vmatprep.subr.mxu0 0.0
      %1642 = vmatpush1.msra.mxu0 0.0
      %1643 = vmatprep.subr.mxu0 0.0
      %1644 = vmatpush1.msra.mxu0 0.0
      %1645 = vmatprep.subr.mxu0 0.0
      %1646 = vmatpush1.msra.mxu0 0.0
      %1647 = vmatprep.subr.mxu0 0.0
      %1648 = vmatpush1.msra.mxu0 0.0
      %1649 = vmatprep.subr.mxu0 0.0
      %1650 = vmatpush1.msra.mxu0 0.0
      %1651 = vmatprep.subr.mxu0 0.0
      %1652 = vmatpush1.msra.mxu0 0.0
      %1653 = vmatprep.subr.mxu0 0.0
      %1654 = vmatpush1.msra.mxu0 0.0
      %1655 = vmatprep.subr.mxu0 0.0
      %1656 = vmatpush1.msra.mxu0 0.0
      %1657 = vmatprep.subr.mxu0 0.0
      %1658 = vmatpush1.msra.mxu0 0.0
      %1659 = vmatprep.subr.mxu0 0.0
      %1660 = vmatpush1.msra.mxu0 0.0
      %1661 = vmatprep.subr.mxu0 0.0
      %1662 = vmatpush1.msra.mxu0 0.0
      %1663 = vmatprep.subr.mxu0 0.0
      %1664 = vmatpush1.msra.mxu0 0.0
      %1665 = vmatprep.mubr.f32.mxu0 0.0
      %1666 = vmatmul.mubr.f32.gmra.mrb[0].mxu0 %v1100
      %v1667 = vpop.f32.mrb[0].mxu0
      %v1668 = vadd.f32 0.0, %v1667
      %v1669 = vpop.f32.mrb[0].mxu0
      %1670 = vdwg.mxu0
      %1671 = vmatprep.subr.mxu0 0.0
      %1672 = vmatpush1.msra.mxu0 %v1389
      %1673 = vmatprep.subr.mxu0 0.0
      %1674 = vmatpush1.msra.mxu0 %v1390
      %1675 = vmatprep.subr.mxu0 0.0
      %1676 = vmatpush1.msra.mxu0 0.0
      %1677 = vmatprep.subr.mxu0 0.0
      %1678 = vmatpush1.msra.mxu0 0.0
      %1679 = vmatprep.subr.mxu0 0.0
      %1680 = vmatpush1.msra.mxu0 0.0
      %1681 = vmatprep.subr.mxu0 0.0
      %1682 = vmatpush1.msra.mxu0 0.0
      %1683 = vmatprep.subr.mxu0 0.0
      %1684 = vmatpush1.msra.mxu0 0.0
      %1685 = vmatprep.subr.mxu0 0.0
      %1686 = vmatpush1.msra.mxu0 0.0
      %1687 = vmatprep.subr.mxu0 0.0
      %1688 = vmatpush1.msra.mxu0 0.0
      %1689 = vmatprep.subr.mxu0 0.0
      %1690 = vmatpush1.msra.mxu0 0.0
      %1691 = vmatprep.subr.mxu0 0.0
      %1692 = vmatpush1.msra.mxu0 0.0
      %1693 = vmatprep.subr.mxu0 0.0
      %1694 = vmatpush1.msra.mxu0 0.0
      %1695 = vmatprep.subr.mxu0 0.0
      %1696 = vmatpush1.msra.mxu0 0.0
      %1697 = vmatprep.subr.mxu0 0.0
      %1698 = vmatpush1.msra.mxu0 0.0
      %1699 = vmatprep.subr.mxu0 0.0
      %1700 = vmatpush1.msra.mxu0 0.0
      %1701 = vmatprep.subr.mxu0 0.0
      %1702 = vmatpush1.msra.mxu0 0.0
      %1703 = vmatprep.subr.mxu0 0.0
      %1704 = vmatpush1.msra.mxu0 0.0
      %1705 = vmatprep.subr.mxu0 0.0
      %1706 = vmatpush1.msra.mxu0 0.0
      %1707 = vmatprep.subr.mxu0 0.0
      %1708 = vmatpush1.msra.mxu0 0.0
      %1709 = vmatprep.subr.mxu0 0.0
      %1710 = vmatpush1.msra.mxu0 0.0
      %1711 = vmatprep.subr.mxu0 0.0
      %1712 = vmatpush1.msra.mxu0 0.0
      %1713 = vmatprep.subr.mxu0 0.0
      %1714 = vmatpush1.msra.mxu0 0.0
      %1715 = vmatprep.subr.mxu0 0.0
      %1716 = vmatpush1.msra.mxu0 0.0
      %1717 = vmatprep.subr.mxu0 0.0
      %1718 = vmatpush1.msra.mxu0 0.0
      %1719 = vmatprep.subr.mxu0 0.0
      %1720 = vmatpush1.msra.mxu0 0.0
      %1721 = vmatprep.subr.mxu0 0.0
      %1722 = vmatpush1.msra.mxu0 0.0
      %1723 = vmatprep.subr.mxu0 0.0
      %1724 = vmatpush1.msra.mxu0 0.0
      %1725 = vmatprep.subr.mxu0 0.0
      %1726 = vmatpush1.msra.mxu0 0.0
      %1727 = vmatprep.subr.mxu0 0.0
      %1728 = vmatpush1.msra.mxu0 0.0
      %1729 = vmatprep.subr.mxu0 0.0
      %1730 = vmatpush1.msra.mxu0 0.0
      %1731 = vmatprep.subr.mxu0 0.0
      %1732 = vmatpush1.msra.mxu0 0.0
      %1733 = vmatprep.subr.mxu0 0.0
      %1734 = vmatpush1.msra.mxu0 0.0
      %1735 = vmatprep.mubr.f32.mxu0 0.0
      %1736 = vmatmul.mubr.f32.gmra.mrb[0].mxu0 %v1172
      %v1737 = vpop.f32.mrb[0].mxu0
      %v1738 = vadd.f32 0.0, %v1737
      %v1739 = vpop.f32.mrb[0].mxu0
      %1740 = vdwg.mxu0
      %1741 = vmatprep.subr.mxu0 0.0
      %1742 = vmatpush1.msra.mxu0 %v1389
      %1743 = vmatprep.subr.mxu0 0.0
      %1744 = vmatpush1.msra.mxu0 %v1390
      %1745 = vmatprep.subr.mxu0 0.0
      %1746 = vmatpush1.msra.mxu0 0.0
      %1747 = vmatprep.subr.mxu0 0.0
      %1748 = vmatpush1.msra.mxu0 0.0
      %1749 = vmatprep.subr.mxu0 0.0
      %1750 = vmatpush1.msra.mxu0 0.0
      %1751 = vmatprep.subr.mxu0 0.0
      %1752 = vmatpush1.msra.mxu0 0.0
      %1753 = vmatprep.subr.mxu0 0.0
      %1754 = vmatpush1.msra.mxu0 0.0
      %1755 = vmatprep.subr.mxu0 0.0
      %1756 = vmatpush1.msra.mxu0 0.0
      %1757 = vmatprep.subr.mxu0 0.0
      %1758 = vmatpush1.msra.mxu0 0.0
      %1759 = vmatprep.subr.mxu0 0.0
      %1760 = vmatpush1.msra.mxu0 0.0
      %1761 = vmatprep.subr.mxu0 0.0
      %1762 = vmatpush1.msra.mxu0 0.0
      %1763 = vmatprep.subr.mxu0 0.0
      %1764 = vmatpush1.msra.mxu0 0.0
      %1765 = vmatprep.subr.mxu0 0.0
      %1766 = vmatpush1.msra.mxu0 0.0
      %1767 = vmatprep.subr.mxu0 0.0
      %1768 = vmatpush1.msra.mxu0 0.0
      %1769 = vmatprep.subr.mxu0 0.0
      %1770 = vmatpush1.msra.mxu0 0.0
      %1771 = vmatprep.subr.mxu0 0.0
      %1772 = vmatpush1.msra.mxu0 0.0
      %1773 = vmatprep.subr.mxu0 0.0
      %1774 = vmatpush1.msra.mxu0 0.0
      %1775 = vmatprep.subr.mxu0 0.0
      %1776 = vmatpush1.msra.mxu0 0.0
      %1777 = vmatprep.subr.mxu0 0.0
      %1778 = vmatpush1.msra.mxu0 0.0
      %1779 = vmatprep.subr.mxu0 0.0
      %1780 = vmatpush1.msra.mxu0 0.0
      %1781 = vmatprep.subr.mxu0 0.0
      %1782 = vmatpush1.msra.mxu0 0.0
      %1783 = vmatprep.subr.mxu0 0.0
      %1784 = vmatpush1.msra.mxu0 0.0
      %1785 = vmatprep.subr.mxu0 0.0
      %1786 = vmatpush1.msra.mxu0 0.0
      %1787 = vmatprep.subr.mxu0 0.0
      %1788 = vmatpush1.msra.mxu0 0.0
      %1789 = vmatprep.subr.mxu0 0.0
      %1790 = vmatpush1.msra.mxu0 0.0
      %1791 = vmatprep.subr.mxu0 0.0
      %1792 = vmatpush1.msra.mxu0 0.0
      %1793 = vmatprep.subr.mxu0 0.0
      %1794 = vmatpush1.msra.mxu0 0.0
      %1795 = vmatprep.subr.mxu0 0.0
      %1796 = vmatpush1.msra.mxu0 0.0
      %1797 = vmatprep.subr.mxu0 0.0
      %1798 = vmatpush1.msra.mxu0 0.0
      %1799 = vmatprep.subr.mxu0 0.0
      %1800 = vmatpush1.msra.mxu0 0.0
      %1801 = vmatprep.subr.mxu0 0.0
      %1802 = vmatpush1.msra.mxu0 0.0
      %1803 = vmatprep.subr.mxu0 0.0
      %1804 = vmatpush1.msra.mxu0 0.0
      %1805 = vmatprep.mubr.f32.mxu0 0.0
      %1806 = vmatmul.mubr.f32.gmra.mrb[0].mxu0 %v1244
      %v1807 = vpop.f32.mrb[0].mxu0
      %v1808 = vadd.f32 0.0, %v1807
      %v1809 = vpop.f32.mrb[0].mxu0
      %1810 = vdwg.mxu0
      %1811 = vmatprep.subr.mxu0 0.0
      %1812 = vmatpush1.msra.mxu0 %v1389
      %1813 = vmatprep.subr.mxu0 0.0
      %1814 = vmatpush1.msra.mxu0 %v1390
      %1815 = vmatprep.subr.mxu0 0.0
      %1816 = vmatpush1.msra.mxu0 0.0
      %1817 = vmatprep.subr.mxu0 0.0
      %1818 = vmatpush1.msra.mxu0 0.0
      %1819 = vmatprep.subr.mxu0 0.0
      %1820 = vmatpush1.msra.mxu0 0.0
      %1821 = vmatprep.subr.mxu0 0.0
      %1822 = vmatpush1.msra.mxu0 0.0
      %1823 = vmatprep.subr.mxu0 0.0
      %1824 = vmatpush1.msra.mxu0 0.0
      %1825 = vmatprep.subr.mxu0 0.0
      %1826 = vmatpush1.msra.mxu0 0.0
      %1827 = vmatprep.subr.mxu0 0.0
      %1828 = vmatpush1.msra.mxu0 0.0
      %1829 = vmatprep.subr.mxu0 0.0
      %1830 = vmatpush1.msra.mxu0 0.0
      %1831 = vmatprep.subr.mxu0 0.0
      %1832 = vmatpush1.msra.mxu0 0.0
      %1833 = vmatprep.subr.mxu0 0.0
      %1834 = vmatpush1.msra.mxu0 0.0
      %1835 = vmatprep.subr.mxu0 0.0
      %1836 = vmatpush1.msra.mxu0 0.0
      %1837 = vmatprep.subr.mxu0 0.0
      %1838 = vmatpush1.msra.mxu0 0.0
      %1839 = vmatprep.subr.mxu0 0.0
      %1840 = vmatpush1.msra.mxu0 0.0
      %1841 = vmatprep.subr.mxu0 0.0
      %1842 = vmatpush1.msra.mxu0 0.0
      %1843 = vmatprep.subr.mxu0 0.0
      %1844 = vmatpush1.msra.mxu0 0.0
      %1845 = vmatprep.subr.mxu0 0.0
      %1846 = vmatpush1.msra.mxu0 0.0
      %1847 = vmatprep.subr.mxu0 0.0
      %1848 = vmatpush1.msra.mxu0 0.0
      %1849 = vmatprep.subr.mxu0 0.0
      %1850 = vmatpush1.msra.mxu0 0.0
      %1851 = vmatprep.subr.mxu0 0.0
      %1852 = vmatpush1.msra.mxu0 0.0
      %1853 = vmatprep.subr.mxu0 0.0
      %1854 = vmatpush1.msra.mxu0 0.0
      %1855 = vmatprep.subr.mxu0 0.0
      %1856 = vmatpush1.msra.mxu0 0.0
      %1857 = vmatprep.subr.mxu0 0.0
      %1858 = vmatpush1.msra.mxu0 0.0
      %1859 = vmatprep.subr.mxu0 0.0
      %1860 = vmatpush1.msra.mxu0 0.0
      %1861 = vmatprep.subr.mxu0 0.0
      %1862 = vmatpush1.msra.mxu0 0.0
      %1863 = vmatprep.subr.mxu0 0.0
      %1864 = vmatpush1.msra.mxu0 0.0
      %1865 = vmatprep.subr.mxu0 0.0
      %1866 = vmatpush1.msra.mxu0 0.0
      %1867 = vmatprep.subr.mxu0 0.0
      %1868 = vmatpush1.msra.mxu0 0.0
      %1869 = vmatprep.subr.mxu0 0.0
      %1870 = vmatpush1.msra.mxu0 0.0
      %1871 = vmatprep.subr.mxu0 0.0
      %1872 = vmatpush1.msra.mxu0 0.0
      %1873 = vmatprep.subr.mxu0 0.0
      %1874 = vmatpush1.msra.mxu0 0.0
      %1875 = vmatprep.mubr.f32.mxu0 0.0
      %1876 = vmatmul.mubr.f32.gmra.mrb[0].mxu0 %v1316
      %v1877 = vpop.f32.mrb[0].mxu0
      %v1878 = vadd.f32 0.0, %v1877
      %v1879 = vpop.f32.mrb[0].mxu0
      %1880 = vdwg.mxu0
      %v1882 = vsel %vm200, %v187, 0
      %1884 = vmatprep.subr.mxu0 0.0
      %1885 = vmatpush1.msra.mxu0 %v1389
      %1886 = vmatprep.subr.mxu0 0.0
      %1887 = vmatpush1.msra.mxu0 %v1390
      %1888 = vmatprep.subr.mxu0 0.0
      %1889 = vmatpush1.msra.mxu0 0.0
      %1890 = vmatprep.subr.mxu0 0.0
      %1891 = vmatpush1.msra.mxu0 0.0
      %1892 = vmatprep.subr.mxu0 0.0
      %1893 = vmatpush1.msra.mxu0 0.0
      %1894 = vmatprep.subr.mxu0 0.0
      %1895 = vmatpush1.msra.mxu0 0.0
      %1896 = vmatprep.subr.mxu0 0.0
      %1897 = vmatpush1.msra.mxu0 0.0
      %1898 = vmatprep.subr.mxu0 0.0
      %1899 = vmatpush1.msra.mxu0 0.0
      %1900 = vmatprep.subr.mxu0 0.0
      %1901 = vmatpush1.msra.mxu0 0.0
      %1902 = vmatprep.subr.mxu0 0.0
      %1903 = vmatpush1.msra.mxu0 0.0
      %1904 = vmatprep.subr.mxu0 0.0
      %1905 = vmatpush1.msra.mxu0 0.0
      %1906 = vmatprep.subr.mxu0 0.0
      %1907 = vmatpush1.msra.mxu0 0.0
      %1908 = vmatprep.subr.mxu0 0.0
      %1909 = vmatpush1.msra.mxu0 0.0
      %1910 = vmatprep.subr.mxu0 0.0
      %1911 = vmatpush1.msra.mxu0 0.0
      %1912 = vmatprep.subr.mxu0 0.0
      %1913 = vmatpush1.msra.mxu0 0.0
      %1914 = vmatprep.subr.mxu0 0.0
      %1915 = vmatpush1.msra.mxu0 0.0
      %1916 = vmatprep.subr.mxu0 0.0
      %1917 = vmatpush1.msra.mxu0 0.0
      %1918 = vmatprep.subr.mxu0 0.0
      %1919 = vmatpush1.msra.mxu0 0.0
      %1920 = vmatprep.subr.mxu0 0.0
      %1921 = vmatpush1.msra.mxu0 0.0
      %1922 = vmatprep.subr.mxu0 0.0
      %1923 = vmatpush1.msra.mxu0 0.0
      %1924 = vmatprep.subr.mxu0 0.0
      %1925 = vmatpush1.msra.mxu0 0.0
      %1926 = vmatprep.subr.mxu0 0.0
      %1927 = vmatpush1.msra.mxu0 0.0
      %1928 = vmatprep.subr.mxu0 0.0
      %1929 = vmatpush1.msra.mxu0 0.0
      %1930 = vmatprep.subr.mxu0 0.0
      %1931 = vmatpush1.msra.mxu0 0.0
      %1932 = vmatprep.subr.mxu0 0.0
      %1933 = vmatpush1.msra.mxu0 0.0
      %1934 = vmatprep.subr.mxu0 0.0
      %1935 = vmatpush1.msra.mxu0 0.0
      %1936 = vmatprep.subr.mxu0 0.0
      %1937 = vmatpush1.msra.mxu0 0.0
      %1938 = vmatprep.subr.mxu0 0.0
      %1939 = vmatpush1.msra.mxu0 0.0
      %1940 = vmatprep.subr.mxu0 0.0
      %1941 = vmatpush1.msra.mxu0 0.0
      %1942 = vmatprep.subr.mxu0 0.0
      %1943 = vmatpush1.msra.mxu0 0.0
      %1944 = vmatprep.subr.mxu0 0.0
      %1945 = vmatpush1.msra.mxu0 0.0
      %1946 = vmatprep.subr.mxu0 0.0
      %1947 = vmatpush1.msra.mxu0 0.0
      %1948 = vmatprep.mubr.f32.mxu0 0.0
      %1949 = vmatmul.mubr.f32.gmra.mrb[0].mxu0 %v1882
      %v1950 = vpop.f32.mrb[0].mxu0
      %v1951 = vadd.f32 0.0, %v1950
      %v1952 = vpop.f32.mrb[0].mxu0
      %1953 = vdwg.mxu0
      %v1954 = vadd.f32 %v881, %v1458
      %v1955 = vadd.f32 %v953, %v1528
      %v1956 = vadd.f32 %v1025, %v1598
      %v1957 = vadd.f32 %v1097, %v1668
      %v1958 = vadd.f32 %v1169, %v1738
      %v1959 = vadd.f32 %v1241, %v1808
      %v1960 = vadd.f32 %v1313, %v1878
      %v1961 = vadd.f32 %v1385, %v1951
      %s1962 = scalar_lea.vmem %s1, 48
      %v1963 = vld [vmem:[%s1962] sm:$0xff]
      %v1964 = vld [vmem:[%s1962 + $0x8] sm:$0xff]
      %1965 = vmatprep.subr.mxu0 0.0
      %1966 = vmatpush1.msra.mxu0 %v1963
      %1967 = vmatprep.subr.mxu0 0.0
      %1968 = vmatpush1.msra.mxu0 %v1964
      %1969 = vmatprep.subr.mxu0 0.0
      %1970 = vmatpush1.msra.mxu0 0.0
      %1971 = vmatprep.subr.mxu0 0.0
      %1972 = vmatpush1.msra.mxu0 0.0
      %1973 = vmatprep.subr.mxu0 0.0
      %1974 = vmatpush1.msra.mxu0 0.0
      %1975 = vmatprep.subr.mxu0 0.0
      %1976 = vmatpush1.msra.mxu0 0.0
      %1977 = vmatprep.subr.mxu0 0.0
      %1978 = vmatpush1.msra.mxu0 0.0
      %1979 = vmatprep.subr.mxu0 0.0
      %1980 = vmatpush1.msra.mxu0 0.0
      %1981 = vmatprep.subr.mxu0 0.0
      %1982 = vmatpush1.msra.mxu0 0.0
      %1983 = vmatprep.subr.mxu0 0.0
      %1984 = vmatpush1.msra.mxu0 0.0
      %1985 = vmatprep.subr.mxu0 0.0
      %1986 = vmatpush1.msra.mxu0 0.0
      %1987 = vmatprep.subr.mxu0 0.0
      %1988 = vmatpush1.msra.mxu0 0.0
      %1989 = vmatprep.subr.mxu0 0.0
      %1990 = vmatpush1.msra.mxu0 0.0
      %1991 = vmatprep.subr.mxu0 0.0
      %1992 = vmatpush1.msra.mxu0 0.0
      %1993 = vmatprep.subr.mxu0 0.0
      %1994 = vmatpush1.msra.mxu0 0.0
      %1995 = vmatprep.subr.mxu0 0.0
      %1996 = vmatpush1.msra.mxu0 0.0
      %1997 = vmatprep.subr.mxu0 0.0
      %1998 = vmatpush1.msra.mxu0 0.0
      %1999 = vmatprep.subr.mxu0 0.0
      %2000 = vmatpush1.msra.mxu0 0.0
      %2001 = vmatprep.subr.mxu0 0.0
      %2002 = vmatpush1.msra.mxu0 0.0
      %2003 = vmatprep.subr.mxu0 0.0
      %2004 = vmatpush1.msra.mxu0 0.0
      %2005 = vmatprep.subr.mxu0 0.0
      %2006 = vmatpush1.msra.mxu0 0.0
      %2007 = vmatprep.subr.mxu0 0.0
      %2008 = vmatpush1.msra.mxu0 0.0
      %2009 = vmatprep.subr.mxu0 0.0
      %2010 = vmatpush1.msra.mxu0 0.0
      %2011 = vmatprep.subr.mxu0 0.0
      %2012 = vmatpush1.msra.mxu0 0.0
      %2013 = vmatprep.subr.mxu0 0.0
      %2014 = vmatpush1.msra.mxu0 0.0
      %2015 = vmatprep.subr.mxu0 0.0
      %2016 = vmatpush1.msra.mxu0 0.0
      %2017 = vmatprep.subr.mxu0 0.0
      %2018 = vmatpush1.msra.mxu0 0.0
      %2019 = vmatprep.subr.mxu0 0.0
      %2020 = vmatpush1.msra.mxu0 0.0
      %2021 = vmatprep.subr.mxu0 0.0
      %2022 = vmatpush1.msra.mxu0 0.0
      %2023 = vmatprep.subr.mxu0 0.0
      %2024 = vmatpush1.msra.mxu0 0.0
      %2025 = vmatprep.subr.mxu0 0.0
      %2026 = vmatpush1.msra.mxu0 0.0
      %2027 = vmatprep.subr.mxu0 0.0
      %2028 = vmatpush1.msra.mxu0 0.0
      %2029 = vmatprep.mubr.f32.mxu0 0.0
      %2030 = vmatmul.mubr.f32.gmra.mrb[0].mxu0 %v278
      %v2031 = vpop.f32.mrb[0].mxu0
      %v2032 = vadd.f32 0.0, %v2031
      %v2033 = vpop.f32.mrb[0].mxu0
      %2034 = vdwg.mxu0
      %2035 = vmatprep.subr.mxu0 0.0
      %2036 = vmatpush1.msra.mxu0 %v1963
      %2037 = vmatprep.subr.mxu0 0.0
      %2038 = vmatpush1.msra.mxu0 %v1964
      %2039 = vmatprep.subr.mxu0 0.0
      %2040 = vmatpush1.msra.mxu0 0.0
      %2041 = vmatprep.subr.mxu0 0.0
      %2042 = vmatpush1.msra.mxu0 0.0
      %2043 = vmatprep.subr.mxu0 0.0
      %2044 = vmatpush1.msra.mxu0 0.0
      %2045 = vmatprep.subr.mxu0 0.0
      %2046 = vmatpush1.msra.mxu0 0.0
      %2047 = vmatprep.subr.mxu0 0.0
      %2048 = vmatpush1.msra.mxu0 0.0
      %2049 = vmatprep.subr.mxu0 0.0
      %2050 = vmatpush1.msra.mxu0 0.0
      %2051 = vmatprep.subr.mxu0 0.0
      %2052 = vmatpush1.msra.mxu0 0.0
      %2053 = vmatprep.subr.mxu0 0.0
      %2054 = vmatpush1.msra.mxu0 0.0
      %2055 = vmatprep.subr.mxu0 0.0
      %2056 = vmatpush1.msra.mxu0 0.0
      %2057 = vmatprep.subr.mxu0 0.0
      %2058 = vmatpush1.msra.mxu0 0.0
      %2059 = vmatprep.subr.mxu0 0.0
      %2060 = vmatpush1.msra.mxu0 0.0
      %2061 = vmatprep.subr.mxu0 0.0
      %2062 = vmatpush1.msra.mxu0 0.0
      %2063 = vmatprep.subr.mxu0 0.0
      %2064 = vmatpush1.msra.mxu0 0.0
      %2065 = vmatprep.subr.mxu0 0.0
      %2066 = vmatpush1.msra.mxu0 0.0
      %2067 = vmatprep.subr.mxu0 0.0
      %2068 = vmatpush1.msra.mxu0 0.0
      %2069 = vmatprep.subr.mxu0 0.0
      %2070 = vmatpush1.msra.mxu0 0.0
      %2071 = vmatprep.subr.mxu0 0.0
      %2072 = vmatpush1.msra.mxu0 0.0
      %2073 = vmatprep.subr.mxu0 0.0
      %2074 = vmatpush1.msra.mxu0 0.0
      %2075 = vmatprep.subr.mxu0 0.0
      %2076 = vmatpush1.msra.mxu0 0.0
      %2077 = vmatprep.subr.mxu0 0.0
      %2078 = vmatpush1.msra.mxu0 0.0
      %2079 = vmatprep.subr.mxu0 0.0
      %2080 = vmatpush1.msra.mxu0 0.0
      %2081 = vmatprep.subr.mxu0 0.0
      %2082 = vmatpush1.msra.mxu0 0.0
      %2083 = vmatprep.subr.mxu0 0.0
      %2084 = vmatpush1.msra.mxu0 0.0
      %2085 = vmatprep.subr.mxu0 0.0
      %2086 = vmatpush1.msra.mxu0 0.0
      %2087 = vmatprep.subr.mxu0 0.0
      %2088 = vmatpush1.msra.mxu0 0.0
      %2089 = vmatprep.subr.mxu0 0.0
      %2090 = vmatpush1.msra.mxu0 0.0
      %2091 = vmatprep.subr.mxu0 0.0
      %2092 = vmatpush1.msra.mxu0 0.0
      %2093 = vmatprep.subr.mxu0 0.0
      %2094 = vmatpush1.msra.mxu0 0.0
      %2095 = vmatprep.subr.mxu0 0.0
      %2096 = vmatpush1.msra.mxu0 0.0
      %2097 = vmatprep.subr.mxu0 0.0
      %2098 = vmatpush1.msra.mxu0 0.0
      %2099 = vmatprep.mubr.f32.mxu0 0.0
      %2100 = vmatmul.mubr.f32.gmra.mrb[0].mxu0 %v355
      %v2101 = vpop.f32.mrb[0].mxu0
      %v2102 = vadd.f32 0.0, %v2101
      %v2103 = vpop.f32.mrb[0].mxu0
      %2104 = vdwg.mxu0
      %2105 = vmatprep.subr.mxu0 0.0
      %2106 = vmatpush1.msra.mxu0 %v1963
      %2107 = vmatprep.subr.mxu0 0.0
      %2108 = vmatpush1.msra.mxu0 %v1964
      %2109 = vmatprep.subr.mxu0 0.0
      %2110 = vmatpush1.msra.mxu0 0.0
      %2111 = vmatprep.subr.mxu0 0.0
      %2112 = vmatpush1.msra.mxu0 0.0
      %2113 = vmatprep.subr.mxu0 0.0
      %2114 = vmatpush1.msra.mxu0 0.0
      %2115 = vmatprep.subr.mxu0 0.0
      %2116 = vmatpush1.msra.mxu0 0.0
      %2117 = vmatprep.subr.mxu0 0.0
      %2118 = vmatpush1.msra.mxu0 0.0
      %2119 = vmatprep.subr.mxu0 0.0
      %2120 = vmatpush1.msra.mxu0 0.0
      %2121 = vmatprep.subr.mxu0 0.0
      %2122 = vmatpush1.msra.mxu0 0.0
      %2123 = vmatprep.subr.mxu0 0.0
      %2124 = vmatpush1.msra.mxu0 0.0
      %2125 = vmatprep.subr.mxu0 0.0
      %2126 = vmatpush1.msra.mxu0 0.0
      %2127 = vmatprep.subr.mxu0 0.0
      %2128 = vmatpush1.msra.mxu0 0.0
      %2129 = vmatprep.subr.mxu0 0.0
      %2130 = vmatpush1.msra.mxu0 0.0
      %2131 = vmatprep.subr.mxu0 0.0
      %2132 = vmatpush1.msra.mxu0 0.0
      %2133 = vmatprep.subr.mxu0 0.0
      %2134 = vmatpush1.msra.mxu0 0.0
      %2135 = vmatprep.subr.mxu0 0.0
      %2136 = vmatpush1.msra.mxu0 0.0
      %2137 = vmatprep.subr.mxu0 0.0
      %2138 = vmatpush1.msra.mxu0 0.0
      %2139 = vmatprep.subr.mxu0 0.0
      %2140 = vmatpush1.msra.mxu0 0.0
      %2141 = vmatprep.subr.mxu0 0.0
      %2142 = vmatpush1.msra.mxu0 0.0
      %2143 = vmatprep.subr.mxu0 0.0
      %2144 = vmatpush1.msra.mxu0 0.0
      %2145 = vmatprep.subr.mxu0 0.0
      %2146 = vmatpush1.msra.mxu0 0.0
      %2147 = vmatprep.subr.mxu0 0.0
      %2148 = vmatpush1.msra.mxu0 0.0
      %2149 = vmatprep.subr.mxu0 0.0
      %2150 = vmatpush1.msra.mxu0 0.0
      %2151 = vmatprep.subr.mxu0 0.0
      %2152 = vmatpush1.msra.mxu0 0.0
      %2153 = vmatprep.subr.mxu0 0.0
      %2154 = vmatpush1.msra.mxu0 0.0
      %2155 = vmatprep.subr.mxu0 0.0
      %2156 = vmatpush1.msra.mxu0 0.0
      %2157 = vmatprep.subr.mxu0 0.0
      %2158 = vmatpush1.msra.mxu0 0.0
      %2159 = vmatprep.subr.mxu0 0.0
      %2160 = vmatpush1.msra.mxu0 0.0
      %2161 = vmatprep.subr.mxu0 0.0
      %2162 = vmatpush1.msra.mxu0 0.0
      %2163 = vmatprep.subr.mxu0 0.0
      %2164 = vmatpush1.msra.mxu0 0.0
      %2165 = vmatprep.subr.mxu0 0.0
      %2166 = vmatpush1.msra.mxu0 0.0
      %2167 = vmatprep.subr.mxu0 0.0
      %2168 = vmatpush1.msra.mxu0 0.0
      %2169 = vmatprep.mubr.f32.mxu0 0.0
      %2170 = vmatmul.mubr.f32.gmra.mrb[0].mxu0 %v432
      %v2171 = vpop.f32.mrb[0].mxu0
      %v2172 = vadd.f32 0.0, %v2171
      %v2173 = vpop.f32.mrb[0].mxu0
      %2174 = vdwg.mxu0
      %2175 = vmatprep.subr.mxu0 0.0
      %2176 = vmatpush1.msra.mxu0 %v1963
      %2177 = vmatprep.subr.mxu0 0.0
      %2178 = vmatpush1.msra.mxu0 %v1964
      %2179 = vmatprep.subr.mxu0 0.0
      %2180 = vmatpush1.msra.mxu0 0.0
      %2181 = vmatprep.subr.mxu0 0.0
      %2182 = vmatpush1.msra.mxu0 0.0
      %2183 = vmatprep.subr.mxu0 0.0
      %2184 = vmatpush1.msra.mxu0 0.0
      %2185 = vmatprep.subr.mxu0 0.0
      %2186 = vmatpush1.msra.mxu0 0.0
      %2187 = vmatprep.subr.mxu0 0.0
      %2188 = vmatpush1.msra.mxu0 0.0
      %2189 = vmatprep.subr.mxu0 0.0
      %2190 = vmatpush1.msra.mxu0 0.0
      %2191 = vmatprep.subr.mxu0 0.0
      %2192 = vmatpush1.msra.mxu0 0.0
      %2193 = vmatprep.subr.mxu0 0.0
      %2194 = vmatpush1.msra.mxu0 0.0
      %2195 = vmatprep.subr.mxu0 0.0
      %2196 = vmatpush1.msra.mxu0 0.0
      %2197 = vmatprep.subr.mxu0 0.0
      %2198 = vmatpush1.msra.mxu0 0.0
      %2199 = vmatprep.subr.mxu0 0.0
      %2200 = vmatpush1.msra.mxu0 0.0
      %2201 = vmatprep.subr.mxu0 0.0
      %2202 = vmatpush1.msra.mxu0 0.0
      %2203 = vmatprep.subr.mxu0 0.0
      %2204 = vmatpush1.msra.mxu0 0.0
      %2205 = vmatprep.subr.mxu0 0.0
      %2206 = vmatpush1.msra.mxu0 0.0
      %2207 = vmatprep.subr.mxu0 0.0
      %2208 = vmatpush1.msra.mxu0 0.0
      %2209 = vmatprep.subr.mxu0 0.0
      %2210 = vmatpush1.msra.mxu0 0.0
      %2211 = vmatprep.subr.mxu0 0.0
      %2212 = vmatpush1.msra.mxu0 0.0
      %2213 = vmatprep.subr.mxu0 0.0
      %2214 = vmatpush1.msra.mxu0 0.0
      %2215 = vmatprep.subr.mxu0 0.0
      %2216 = vmatpush1.msra.mxu0 0.0
      %2217 = vmatprep.subr.mxu0 0.0
      %2218 = vmatpush1.msra.mxu0 0.0
      %2219 = vmatprep.subr.mxu0 0.0
      %2220 = vmatpush1.msra.mxu0 0.0
      %2221 = vmatprep.subr.mxu0 0.0
      %2222 = vmatpush1.msra.mxu0 0.0
      %2223 = vmatprep.subr.mxu0 0.0
      %2224 = vmatpush1.msra.mxu0 0.0
      %2225 = vmatprep.subr.mxu0 0.0
      %2226 = vmatpush1.msra.mxu0 0.0
      %2227 = vmatprep.subr.mxu0 0.0
      %2228 = vmatpush1.msra.mxu0 0.0
      %2229 = vmatprep.subr.mxu0 0.0
      %2230 = vmatpush1.msra.mxu0 0.0
      %2231 = vmatprep.subr.mxu0 0.0
      %2232 = vmatpush1.msra.mxu0 0.0
      %2233 = vmatprep.subr.mxu0 0.0
      %2234 = vmatpush1.msra.mxu0 0.0
      %2235 = vmatprep.subr.mxu0 0.0
      %2236 = vmatpush1.msra.mxu0 0.0
      %2237 = vmatprep.subr.mxu0 0.0
      %2238 = vmatpush1.msra.mxu0 0.0
      %2239 = vmatprep.mubr.f32.mxu0 0.0
      %2240 = vmatmul.mubr.f32.gmra.mrb[0].mxu0 %v509
      %v2241 = vpop.f32.mrb[0].mxu0
      %v2242 = vadd.f32 0.0, %v2241
      %v2243 = vpop.f32.mrb[0].mxu0
      %2244 = vdwg.mxu0
      %2245 = vmatprep.subr.mxu0 0.0
      %2246 = vmatpush1.msra.mxu0 %v1963
      %2247 = vmatprep.subr.mxu0 0.0
      %2248 = vmatpush1.msra.mxu0 %v1964
      %2249 = vmatprep.subr.mxu0 0.0
      %2250 = vmatpush1.msra.mxu0 0.0
      %2251 = vmatprep.subr.mxu0 0.0
      %2252 = vmatpush1.msra.mxu0 0.0
      %2253 = vmatprep.subr.mxu0 0.0
      %2254 = vmatpush1.msra.mxu0 0.0
      %2255 = vmatprep.subr.mxu0 0.0
      %2256 = vmatpush1.msra.mxu0 0.0
      %2257 = vmatprep.subr.mxu0 0.0
      %2258 = vmatpush1.msra.mxu0 0.0
      %2259 = vmatprep.subr.mxu0 0.0
      %2260 = vmatpush1.msra.mxu0 0.0
      %2261 = vmatprep.subr.mxu0 0.0
      %2262 = vmatpush1.msra.mxu0 0.0
      %2263 = vmatprep.subr.mxu0 0.0
      %2264 = vmatpush1.msra.mxu0 0.0
      %2265 = vmatprep.subr.mxu0 0.0
      %2266 = vmatpush1.msra.mxu0 0.0
      %2267 = vmatprep.subr.mxu0 0.0
      %2268 = vmatpush1.msra.mxu0 0.0
      %2269 = vmatprep.subr.mxu0 0.0
      %2270 = vmatpush1.msra.mxu0 0.0
      %2271 = vmatprep.subr.mxu0 0.0
      %2272 = vmatpush1.msra.mxu0 0.0
      %2273 = vmatprep.subr.mxu0 0.0
      %2274 = vmatpush1.msra.mxu0 0.0
      %2275 = vmatprep.subr.mxu0 0.0
      %2276 = vmatpush1.msra.mxu0 0.0
      %2277 = vmatprep.subr.mxu0 0.0
      %2278 = vmatpush1.msra.mxu0 0.0
      %2279 = vmatprep.subr.mxu0 0.0
      %2280 = vmatpush1.msra.mxu0 0.0
      %2281 = vmatprep.subr.mxu0 0.0
      %2282 = vmatpush1.msra.mxu0 0.0
      %2283 = vmatprep.subr.mxu0 0.0
      %2284 = vmatpush1.msra.mxu0 0.0
      %2285 = vmatprep.subr.mxu0 0.0
      %2286 = vmatpush1.msra.mxu0 0.0
      %2287 = vmatprep.subr.mxu0 0.0
      %2288 = vmatpush1.msra.mxu0 0.0
      %2289 = vmatprep.subr.mxu0 0.0
      %2290 = vmatpush1.msra.mxu0 0.0
      %2291 = vmatprep.subr.mxu0 0.0
      %2292 = vmatpush1.msra.mxu0 0.0
      %2293 = vmatprep.subr.mxu0 0.0
      %2294 = vmatpush1.msra.mxu0 0.0
      %2295 = vmatprep.subr.mxu0 0.0
      %2296 = vmatpush1.msra.mxu0 0.0
      %2297 = vmatprep.subr.mxu0 0.0
      %2298 = vmatpush1.msra.mxu0 0.0
      %2299 = vmatprep.subr.mxu0 0.0
      %2300 = vmatpush1.msra.mxu0 0.0
      %2301 = vmatprep.subr.mxu0 0.0
      %2302 = vmatpush1.msra.mxu0 0.0
      %2303 = vmatprep.subr.mxu0 0.0
      %2304 = vmatpush1.msra.mxu0 0.0
      %2305 = vmatprep.subr.mxu0 0.0
      %2306 = vmatpush1.msra.mxu0 0.0
      %2307 = vmatprep.subr.mxu0 0.0
      %2308 = vmatpush1.msra.mxu0 0.0
      %2309 = vmatprep.mubr.f32.mxu0 0.0
      %2310 = vmatmul.mubr.f32.gmra.mrb[0].mxu0 %v586
      %v2311 = vpop.f32.mrb[0].mxu0
      %v2312 = vadd.f32 0.0, %v2311
      %v2313 = vpop.f32.mrb[0].mxu0
      %2314 = vdwg.mxu0
      %2315 = vmatprep.subr.mxu0 0.0
      %2316 = vmatpush1.msra.mxu0 %v1963
      %2317 = vmatprep.subr.mxu0 0.0
      %2318 = vmatpush1.msra.mxu0 %v1964
      %2319 = vmatprep.subr.mxu0 0.0
      %2320 = vmatpush1.msra.mxu0 0.0
      %2321 = vmatprep.subr.mxu0 0.0
      %2322 = vmatpush1.msra.mxu0 0.0
      %2323 = vmatprep.subr.mxu0 0.0
      %2324 = vmatpush1.msra.mxu0 0.0
      %2325 = vmatprep.subr.mxu0 0.0
      %2326 = vmatpush1.msra.mxu0 0.0
      %2327 = vmatprep.subr.mxu0 0.0
      %2328 = vmatpush1.msra.mxu0 0.0
      %2329 = vmatprep.subr.mxu0 0.0
      %2330 = vmatpush1.msra.mxu0 0.0
      %2331 = vmatprep.subr.mxu0 0.0
      %2332 = vmatpush1.msra.mxu0 0.0
      %2333 = vmatprep.subr.mxu0 0.0
      %2334 = vmatpush1.msra.mxu0 0.0
      %2335 = vmatprep.subr.mxu0 0.0
      %2336 = vmatpush1.msra.mxu0 0.0
      %2337 = vmatprep.subr.mxu0 0.0
      %2338 = vmatpush1.msra.mxu0 0.0
      %2339 = vmatprep.subr.mxu0 0.0
      %2340 = vmatpush1.msra.mxu0 0.0
      %2341 = vmatprep.subr.mxu0 0.0
      %2342 = vmatpush1.msra.mxu0 0.0
      %2343 = vmatprep.subr.mxu0 0.0
      %2344 = vmatpush1.msra.mxu0 0.0
      %2345 = vmatprep.subr.mxu0 0.0
      %2346 = vmatpush1.msra.mxu0 0.0
      %2347 = vmatprep.subr.mxu0 0.0
      %2348 = vmatpush1.msra.mxu0 0.0
      %2349 = vmatprep.subr.mxu0 0.0
      %2350 = vmatpush1.msra.mxu0 0.0
      %2351 = vmatprep.subr.mxu0 0.0
      %2352 = vmatpush1.msra.mxu0 0.0
      %2353 = vmatprep.subr.mxu0 0.0
      %2354 = vmatpush1.msra.mxu0 0.0
      %2355 = vmatprep.subr.mxu0 0.0
      %2356 = vmatpush1.msra.mxu0 0.0
      %2357 = vmatprep.subr.mxu0 0.0
      %2358 = vmatpush1.msra.mxu0 0.0
      %2359 = vmatprep.subr.mxu0 0.0
      %2360 = vmatpush1.msra.mxu0 0.0
      %2361 = vmatprep.subr.mxu0 0.0
      %2362 = vmatpush1.msra.mxu0 0.0
      %2363 = vmatprep.subr.mxu0 0.0
      %2364 = vmatpush1.msra.mxu0 0.0
      %2365 = vmatprep.subr.mxu0 0.0
      %2366 = vmatpush1.msra.mxu0 0.0
      %2367 = vmatprep.subr.mxu0 0.0
      %2368 = vmatpush1.msra.mxu0 0.0
      %2369 = vmatprep.subr.mxu0 0.0
      %2370 = vmatpush1.msra.mxu0 0.0
      %2371 = vmatprep.subr.mxu0 0.0
      %2372 = vmatpush1.msra.mxu0 0.0
      %2373 = vmatprep.subr.mxu0 0.0
      %2374 = vmatpush1.msra.mxu0 0.0
      %2375 = vmatprep.subr.mxu0 0.0
      %2376 = vmatpush1.msra.mxu0 0.0
      %2377 = vmatprep.subr.mxu0 0.0
      %2378 = vmatpush1.msra.mxu0 0.0
      %2379 = vmatprep.mubr.f32.mxu0 0.0
      %2380 = vmatmul.mubr.f32.gmra.mrb[0].mxu0 %v663
      %v2381 = vpop.f32.mrb[0].mxu0
      %v2382 = vadd.f32 0.0, %v2381
      %v2383 = vpop.f32.mrb[0].mxu0
      %2384 = vdwg.mxu0
      %2385 = vmatprep.subr.mxu0 0.0
      %2386 = vmatpush1.msra.mxu0 %v1963
      %2387 = vmatprep.subr.mxu0 0.0
      %2388 = vmatpush1.msra.mxu0 %v1964
      %2389 = vmatprep.subr.mxu0 0.0
      %2390 = vmatpush1.msra.mxu0 0.0
      %2391 = vmatprep.subr.mxu0 0.0
      %2392 = vmatpush1.msra.mxu0 0.0
      %2393 = vmatprep.subr.mxu0 0.0
      %2394 = vmatpush1.msra.mxu0 0.0
      %2395 = vmatprep.subr.mxu0 0.0
      %2396 = vmatpush1.msra.mxu0 0.0
      %2397 = vmatprep.subr.mxu0 0.0
      %2398 = vmatpush1.msra.mxu0 0.0
      %2399 = vmatprep.subr.mxu0 0.0
      %2400 = vmatpush1.msra.mxu0 0.0
      %2401 = vmatprep.subr.mxu0 0.0
      %2402 = vmatpush1.msra.mxu0 0.0
      %2403 = vmatprep.subr.mxu0 0.0
      %2404 = vmatpush1.msra.mxu0 0.0
      %2405 = vmatprep.subr.mxu0 0.0
      %2406 = vmatpush1.msra.mxu0 0.0
      %2407 = vmatprep.subr.mxu0 0.0
      %2408 = vmatpush1.msra.mxu0 0.0
      %2409 = vmatprep.subr.mxu0 0.0
      %2410 = vmatpush1.msra.mxu0 0.0
      %2411 = vmatprep.subr.mxu0 0.0
      %2412 = vmatpush1.msra.mxu0 0.0
      %2413 = vmatprep.subr.mxu0 0.0
      %2414 = vmatpush1.msra.mxu0 0.0
      %2415 = vmatprep.subr.mxu0 0.0
      %2416 = vmatpush1.msra.mxu0 0.0
      %2417 = vmatprep.subr.mxu0 0.0
      %2418 = vmatpush1.msra.mxu0 0.0
      %2419 = vmatprep.subr.mxu0 0.0
      %2420 = vmatpush1.msra.mxu0 0.0
      %2421 = vmatprep.subr.mxu0 0.0
      %2422 = vmatpush1.msra.mxu0 0.0
      %2423 = vmatprep.subr.mxu0 0.0
      %2424 = vmatpush1.msra.mxu0 0.0
      %2425 = vmatprep.subr.mxu0 0.0
      %2426 = vmatpush1.msra.mxu0 0.0
      %2427 = vmatprep.subr.mxu0 0.0
      %2428 = vmatpush1.msra.mxu0 0.0
      %2429 = vmatprep.subr.mxu0 0.0
      %2430 = vmatpush1.msra.mxu0 0.0
      %2431 = vmatprep.subr.mxu0 0.0
      %2432 = vmatpush1.msra.mxu0 0.0
      %2433 = vmatprep.subr.mxu0 0.0
      %2434 = vmatpush1.msra.mxu0 0.0
      %2435 = vmatprep.subr.mxu0 0.0
      %2436 = vmatpush1.msra.mxu0 0.0
      %2437 = vmatprep.subr.mxu0 0.0
      %2438 = vmatpush1.msra.mxu0 0.0
      %2439 = vmatprep.subr.mxu0 0.0
      %2440 = vmatpush1.msra.mxu0 0.0
      %2441 = vmatprep.subr.mxu0 0.0
      %2442 = vmatpush1.msra.mxu0 0.0
      %2443 = vmatprep.subr.mxu0 0.0
      %2444 = vmatpush1.msra.mxu0 0.0
      %2445 = vmatprep.subr.mxu0 0.0
      %2446 = vmatpush1.msra.mxu0 0.0
      %2447 = vmatprep.subr.mxu0 0.0
      %2448 = vmatpush1.msra.mxu0 0.0
      %2449 = vmatprep.mubr.f32.mxu0 0.0
      %2450 = vmatmul.mubr.f32.gmra.mrb[0].mxu0 %v740
      %v2451 = vpop.f32.mrb[0].mxu0
      %v2452 = vadd.f32 0.0, %v2451
      %v2453 = vpop.f32.mrb[0].mxu0
      %2454 = vdwg.mxu0
      %v2456 = vrot.slane %v187, 1
      %v2457 = vrot.slane %v188, 1
      %v2458 = vsel %vm196, %v2456, %v2457
      %v2459 = vsel %vm200, %v2458, 0
      %2461 = vmatprep.subr.mxu0 0.0
      %2462 = vmatpush1.msra.mxu0 %v1963
      %2463 = vmatprep.subr.mxu0 0.0
      %2464 = vmatpush1.msra.mxu0 %v1964
      %2465 = vmatprep.subr.mxu0 0.0
      %2466 = vmatpush1.msra.mxu0 0.0
      %2467 = vmatprep.subr.mxu0 0.0
      %2468 = vmatpush1.msra.mxu0 0.0
      %2469 = vmatprep.subr.mxu0 0.0
      %2470 = vmatpush1.msra.mxu0 0.0
      %2471 = vmatprep.subr.mxu0 0.0
      %2472 = vmatpush1.msra.mxu0 0.0
      %2473 = vmatprep.subr.mxu0 0.0
      %2474 = vmatpush1.msra.mxu0 0.0
      %2475 = vmatprep.subr.mxu0 0.0
      %2476 = vmatpush1.msra.mxu0 0.0
      %2477 = vmatprep.subr.mxu0 0.0
      %2478 = vmatpush1.msra.mxu0 0.0
      %2479 = vmatprep.subr.mxu0 0.0
      %2480 = vmatpush1.msra.mxu0 0.0
      %2481 = vmatprep.subr.mxu0 0.0
      %2482 = vmatpush1.msra.mxu0 0.0
      %2483 = vmatprep.subr.mxu0 0.0
      %2484 = vmatpush1.msra.mxu0 0.0
      %2485 = vmatprep.subr.mxu0 0.0
      %2486 = vmatpush1.msra.mxu0 0.0
      %2487 = vmatprep.subr.mxu0 0.0
      %2488 = vmatpush1.msra.mxu0 0.0
      %2489 = vmatprep.subr.mxu0 0.0
      %2490 = vmatpush1.msra.mxu0 0.0
      %2491 = vmatprep.subr.mxu0 0.0
      %2492 = vmatpush1.msra.mxu0 0.0
      %2493 = vmatprep.subr.mxu0 0.0
      %2494 = vmatpush1.msra.mxu0 0.0
      %2495 = vmatprep.subr.mxu0 0.0
      %2496 = vmatpush1.msra.mxu0 0.0
      %2497 = vmatprep.subr.mxu0 0.0
      %2498 = vmatpush1.msra.mxu0 0.0
      %2499 = vmatprep.subr.mxu0 0.0
      %2500 = vmatpush1.msra.mxu0 0.0
      %2501 = vmatprep.subr.mxu0 0.0
      %2502 = vmatpush1.msra.mxu0 0.0
      %2503 = vmatprep.subr.mxu0 0.0
      %2504 = vmatpush1.msra.mxu0 0.0
      %2505 = vmatprep.subr.mxu0 0.0
      %2506 = vmatpush1.msra.mxu0 0.0
      %2507 = vmatprep.subr.mxu0 0.0
      %2508 = vmatpush1.msra.mxu0 0.0
      %2509 = vmatprep.subr.mxu0 0.0
      %2510 = vmatpush1.msra.mxu0 0.0
      %2511 = vmatprep.subr.mxu0 0.0
      %2512 = vmatpush1.msra.mxu0 0.0
      %2513 = vmatprep.subr.mxu0 0.0
      %2514 = vmatpush1.msra.mxu0 0.0
      %2515 = vmatprep.subr.mxu0 0.0
      %2516 = vmatpush1.msra.mxu0 0.0
      %2517 = vmatprep.subr.mxu0 0.0
      %2518 = vmatpush1.msra.mxu0 0.0
      %2519 = vmatprep.subr.mxu0 0.0
      %2520 = vmatpush1.msra.mxu0 0.0
      %2521 = vmatprep.subr.mxu0 0.0
      %2522 = vmatpush1.msra.mxu0 0.0
      %2523 = vmatprep.subr.mxu0 0.0
      %2524 = vmatpush1.msra.mxu0 0.0
      %2525 = vmatprep.mubr.f32.mxu0 0.0
      %2526 = vmatmul.mubr.f32.gmra.mrb[0].mxu0 %v2459
      %v2527 = vpop.f32.mrb[0].mxu0
      %v2528 = vadd.f32 0.0, %v2527
      %v2529 = vpop.f32.mrb[0].mxu0
      %2530 = vdwg.mxu0
      %v2531 = vadd.f32 %v1954, %v2032
      %v2532 = vadd.f32 %v1955, %v2102
      %v2533 = vadd.f32 %v1956, %v2172
      %v2534 = vadd.f32 %v1957, %v2242
      %v2535 = vadd.f32 %v1958, %v2312
      %v2536 = vadd.f32 %v1959, %v2382
      %v2537 = vadd.f32 %v1960, %v2452
      %v2538 = vadd.f32 %v1961, %v2528
      %v2539 = vld [vmem:[%s2] sm:$0x1]
      %v2541 = vlaneseq
      %v2542 = vshrl.u32 %v2541, 7
      %v2543 = vsub.s32 0, %v2542
      %v2544 = vrot.slane %v2539, %v2543
      %v2546 = vadd.f32 %v2531, %v2544
      %v2547 = vadd.f32 %v2532, %v2544
      %v2548 = vadd.f32 %v2533, %v2544
      %v2549 = vadd.f32 %v2534, %v2544
      %v2550 = vadd.f32 %v2535, %v2544
      %v2551 = vadd.f32 %v2536, %v2544
      %v2552 = vadd.f32 %v2537, %v2544
      %v2553 = vadd.f32 %v2538, %v2544
      %vm2554 = vcmask 31744
      %2555 = vst.msk [vmem:[%s170] sm:$0xff] %vm2554, %v2546
      %2556 = vst.msk [vmem:[%s170 + $0x8] sm:$0xff] %vm2554, %v2547
      %2557 = vst.msk [vmem:[%s170 + $0x10] sm:$0xff] %vm2554, %v2548
      %2558 = vst.msk [vmem:[%s170 + $0x18] sm:$0xff] %vm2554, %v2549
      %2559 = vst.msk [vmem:[%s170 + $0x20] sm:$0xff] %vm2554, %v2550
      %2560 = vst.msk [vmem:[%s170 + $0x28] sm:$0xff] %vm2554, %v2551
      %2561 = vst.msk [vmem:[%s170 + $0x30] sm:$0xff] %vm2554, %v2552
      %2562 = vst.msk [vmem:[%s170 + $0x38] sm:$0xff] %vm2554, %v2553
      %p2563 = scmp.lt.s32.totalorder %s14, 1
      %s2564 = scalar_select %p2563, %s14, 1
      %s2565 = smul.addr %s2564, 8
      %s2566 = smul.addr %s2565, 8
      %s2567 = scalar_lea.vmem %s3, %s2566
      // Predicated region
      $region33: #{downsample_forward.1} parent=31 // pred_check
        %p2568 = pneg %p100
      $region34: #{downsample_forward.1} parent=31 // pred_check_branch
        %2570 = sbr.rel (%p2568) target = $region36
      $region35: #{downsample_forward.1} parent=31 // pred_region
        _
      $region36: #{downsample_forward.1} parent=31 // pred_fallthru
        _
    $region32: #{downsample_forward.1} parent=5 // pred_fallthru
      _
    %p2571 = scmp.le.s32.totalorder 2, %s9
    // Predicated region
    $region37: #{downsample_forward.1} parent=5 // pred_check
      %p2572 = pneg %p2571
    $region38: #{downsample_forward.1} parent=5 // pred_check_branch
      %2574 = sbr.rel (%p2572) target = $region40
    $region39: #{downsample_forward.1} parent=5 // pred_region
      %s2575 = ssub.s32 %s9, 2
      // Predicated region
      $region41: #{downsample_forward.1} parent=39 // pred_check
        %p2576 = pneg %p106
      $region42: #{downsample_forward.1} parent=39 // pred_check_branch
        %2578 = sbr.rel (%p2576) target = $region44
      $region43: #{downsample_forward.1} parent=39 // pred_region
        %p2579 = scmp.lt.s32.totalorder %s15, 1
        %s2580 = scalar_select %p2579, %s15, 1
        %s2581 = smul.addr %s2580, 8
        %s2582 = smul.addr %s2581, 8
        %s2583 = scalar_lea.vmem %s3, %s2582
      $region44: #{downsample_forward.1} parent=39 // pred_fallthru
        _
    $region40: #{downsample_forward.1} parent=5 // pred_fallthru
      _
  $region6: #{downsample_forward.1} parent=0 // loop_footer
    %s13 = sadd.s32 1, %s9
  $region7: #{downsample_forward.1} parent=0 // loop_footer_branch
    %8 = sbr.rel target = $region3
  $region8: #{downsample_forward.1} parent=0 // loop_exit
    _

</llo_original>
